<compile_context>
chip_gen: v5e
topology: v5e:2x2
jax: 0.10.0
libtpu: 0.0.40
codegen_flags: <defaults>
</compile_context>

<pallas_src>
import jax
import jax.numpy as jnp
from jax import lax
from jax.experimental import pallas as pl
from jax.experimental.pallas import tpu as pltpu


B_TILE = 8  # batch rows packed into the sublane dimension (f32)


def _g(x):
    # minGRU continuous activation
    return jnp.where(x >= 0, x + 0.5, jax.nn.sigmoid(x))


def _round_up(x, m):
    return (x + m - 1) // m * m


def mingru_net_kernel(x_ref, wh_ref, wg_ref, wout_ref, wlin_ref, blin_ref,
                      wo_ref, bo_ref, out_ref,
                      x_sc, h_sc, a_sc, b_sc, hseq_sc):
    # grid = (batch_tiles, num_layers); layer axis is the inner ("arbitrary") one.
    l = pl.program_id(1)
    num_l = pl.num_programs(1)

    Tp, Bt, Dp = x_ref.shape          # time-major input tile [T, B_TILE, D_pad]
    M = Tp * Bt
    cdt = wh_ref.dtype                # MXU operand dtype (f32 or bf16)

    @pl.when(l == 0)
    def _init():
        # new batch tile: load activations (time-major flat slab) and reset h.
        x_sc[...] = x_ref[...].reshape(M, Dp).astype(jnp.float32)
        h_sc[...] = jnp.zeros_like(h_sc)

    x = x_sc[...]                                    # [M, Dp] f32 (residual)
    xc = x.astype(cdt)

    # minGRU input projections — one big MXU matmul each (M = T*B_TILE rows).
    hidden = jnp.dot(xc, wh_ref[0], preferred_element_type=jnp.float32)   # [M, Dip]
    gate   = jnp.dot(xc, wg_ref[0], preferred_element_type=jnp.float32)   # [M, Dip]
    z = jax.nn.sigmoid(gate)
    # precompute the scan coefficients outside the serial chain:
    a_sc[...] = 1.0 - z                                                   # a_t
    b_sc[...] = z * _g(hidden)                                            # b_t

    # sequential recurrence h_t = a_t * h_{t-1} + b_t over time, full-width
    # [B_TILE, Dip] updates, results written into VMEM scratch (no concat).
    def scan_body(t, h):
        off = pl.multiple_of(t * Bt, Bt)
        h = a_sc[pl.ds(off, Bt), :] * h + b_sc[pl.ds(off, Bt), :]
        hseq_sc[pl.ds(off, Bt), :] = h
        return h

    h_last = lax.fori_loop(0, Tp, scan_body, h_sc[...], unroll=(Tp <= 32))
    h_sc[...] = h_last                               # prev_hidden for next layer

    # rnn to_out projection, per-layer Linear, residual add.
    y = jnp.dot(hseq_sc[...].astype(cdt), wout_ref[0],
                preferred_element_type=jnp.float32)                        # [M, Dp]
    y = jnp.dot(y.astype(cdt), wlin_ref[0],
                preferred_element_type=jnp.float32) + blin_ref[0].astype(jnp.float32)
    # dropout: eval-mode identity  # TODO(synk): training-mode dropout masking not implemented
    x_new = y + x
    x_sc[...] = x_new

    @pl.when(l == num_l - 1)
    def _final():
        logits = jnp.dot(x_new.astype(cdt), wo_ref[...],
                         preferred_element_type=jnp.float32) + bo_ref[...].astype(jnp.float32)
        out_ref[...] = logits.reshape(Tp, Bt, -1).astype(out_ref.dtype)


def mingru_network_forward(tokens, params, compute_dtype=jnp.float32):
    emb = params['embedding']                        # [V, D]
    wh, wg, wout = params['wh'], params['wg'], params['wout']
    wlin, blin = params['wlin'], params['blin']
    wo, bo = params['wo'], params['bo']

    B, T = tokens.shape
    V, D = emb.shape
    L, _, Di = wh.shape

    # lane-dense padded dims (exact: padding contributes zeros through every
    # projection and is sliced away at the end).
    Dp = _round_up(D, 128)
    Dip = _round_up(Di, 128)
    Vp = _round_up(V, 128)
    Bp = _round_up(B, B_TILE)
    nb = Bp // B_TILE

    def padw(w, shape):
        pads = [(0, s - d) for s, d in zip(shape, w.shape)]
        return jnp.pad(w, pads).astype(compute_dtype)

    wh_p = padw(wh, (L, Dp, Dip))
    wg_p = padw(wg, (L, Dp, Dip))
    wout_p = padw(wout, (L, Dip, Dp))
    wlin_p = padw(wlin, (L, Dp, Dp))
    blin_p = jnp.pad(blin, ((0, 0), (0, 0), (0, Dp - D))).astype(jnp.float32)
    wo_p = padw(wo, (Dp, Vp))
    bo_p = jnp.pad(bo, ((0, 0), (0, Vp - V))).astype(jnp.float32)

    # embedding gather stays in plain-JAX glue; pad features + batch, then go
    # time-major so each time step of the scan is a contiguous sublane slab.
    emb_p = jnp.pad(emb, ((0, 0), (0, Dp - D)))
    x_emb = emb_p[tokens]                            # [B, T, Dp]
    x_emb = jnp.pad(x_emb, ((0, Bp - B), (0, 0), (0, 0)))
    x_tm = jnp.transpose(x_emb, (1, 0, 2)).astype(compute_dtype)   # [T, Bp, Dp]

    m_rows = Bp * T
    flops = int(m_rows * (L * 2 * (3 * Dp * Dip + Dp * Dp) + 2 * Dp * Vp))
    transcendentals = int(m_rows * L * Dip * 2)
    bytes_accessed = int(sum(a.size * a.dtype.itemsize
                             for a in (x_tm, wh_p, wg_p, wout_p, wlin_p,
                                       blin_p, wo_p, bo_p))
                         + T * Bp * Vp * 4)

    grid_spec = pltpu.PrefetchScalarGridSpec(
        num_scalar_prefetch=0,
        grid=(nb, L),
        in_specs=[
            pl.BlockSpec((T, B_TILE, Dp), lambda b, l: (0, b, 0)),   # x (time-major)
            pl.BlockSpec((1, Dp, Dip), lambda b, l: (l, 0, 0)),      # wh[l]
            pl.BlockSpec((1, Dp, Dip), lambda b, l: (l, 0, 0)),      # wg[l]
            pl.BlockSpec((1, Dip, Dp), lambda b, l: (l, 0, 0)),      # wout[l]
            pl.BlockSpec((1, Dp, Dp), lambda b, l: (l, 0, 0)),       # wlin[l]
            pl.BlockSpec((1, 1, Dp), lambda b, l: (l, 0, 0)),        # blin[l]
            pl.BlockSpec((Dp, Vp), lambda b, l: (0, 0)),             # wo (resident)
            pl.BlockSpec((1, Vp), lambda b, l: (0, 0)),              # bo (resident)
        ],
        out_specs=pl.BlockSpec((T, B_TILE, Vp), lambda b, l: (0, b, 0)),
        scratch_shapes=[
            pltpu.VMEM((T * B_TILE, Dp), jnp.float32),   # x / residual carry
            pltpu.VMEM((B_TILE, Dip), jnp.float32),      # prev_hidden carry
            pltpu.VMEM((T * B_TILE, Dip), jnp.float32),  # a = 1 - z
            pltpu.VMEM((T * B_TILE, Dip), jnp.float32),  # b = z * g(hidden)
            pltpu.VMEM((T * B_TILE, Dip), jnp.float32),  # h_seq
        ],
    )

    out_tm = pl.pallas_call(
        mingru_net_kernel,
        out_shape=jax.ShapeDtypeStruct((T, Bp, Vp), jnp.float32),
        grid_spec=grid_spec,
        compiler_params=pltpu.CompilerParams(
            dimension_semantics=("parallel", "arbitrary"),
            vmem_limit_bytes=32 * 1024 * 1024),
        cost_estimate=pl.CostEstimate(flops=flops,
                                      transcendentals=transcendentals,
                                      bytes_accessed=bytes_accessed),
    )(x_tm, wh_p, wg_p, wout_p, wlin_p, blin_p, wo_p, bo_p)

    logits = jnp.transpose(out_tm, (1, 0, 2))[:B, :, :V]
    return logits


def reference_forward(tokens, params):
    """Pure-JAX reference of the same forward pass (for correctness check)."""
    x = params['embedding'][tokens]
    B, T, D = x.shape
    L, _, Di = params['wh'].shape
    h = jnp.zeros((B, 1, Di), jnp.float32)
    for l in range(L):
        residual = x
        hidden = x @ params['wh'][l]
        gate = x @ params['wg'][l]
        z = jax.nn.sigmoid(gate)
        ht = _g(hidden)
        outs = []
        hc = h
        for t in range(T):
            hc = (1.0 - z[:, t:t + 1]) * hc + z[:, t:t + 1] * ht[:, t:t + 1]
            outs.append(hc)
        h_seq = jnp.concatenate(outs, axis=1)
        h = hc
        y = h_seq @ params['wout'][l]
        y = y @ params['wlin'][l] + params['blin'][l]
        x = y + residual
    return x @ params['wo'] + params['bo']


def make_params(key, vocab_size, embedding_dim, num_layers, expansion_factor):
    D = embedding_dim
    Di = int(D * expansion_factor)
    V = vocab_size
    L = num_layers
    ks = jax.random.split(key, 8)
    scale = 0.1
    emb = jax.random.normal(ks[0], (V, D), jnp.float32) * scale
    emb = emb.at[0].set(0.0)                     # padding_idx=0
    params = {
        'embedding': emb,
        # pre-transposed (right-multiply) layouts:
        'wh':   jax.random.normal(ks[1], (L, D, Di), jnp.float32) * scale,  # minGRU hidden proj
        'wg':   jax.random.normal(ks[2], (L, D, Di), jnp.float32) * scale,  # minGRU gate proj
        'wout': jax.random.normal(ks[3], (L, Di, D), jnp.float32) * scale,  # minGRU to_out (no bias)
        'wlin': jax.random.normal(ks[4], (L, D, D), jnp.float32) * scale,   # per-layer Linear weight^T
        'blin': jax.random.normal(ks[5], (L, 1, D), jnp.float32) * scale,   # per-layer Linear bias
        'wo':   jax.random.normal(ks[6], (D, V), jnp.float32) * scale,      # output_layer weight^T
        'bo':   jax.random.normal(ks[7], (1, V), jnp.float32) * scale,      # output_layer bias
    }
    return params


if __name__ == "__main__":
    # Small shapes consistent with the module: batch=2, seq=8, embedding_dim=32,
    # expansion_factor=2 (inner=64), num_layers=3, vocab_size=16.
    B, T = 2, 8
    vocab_size, embedding_dim, num_layers, expansion_factor = 16, 32, 3, 2

    key = jax.random.PRNGKey(0)
    kp, kt = jax.random.split(key)
    params = make_params(kp, vocab_size, embedding_dim, num_layers, expansion_factor)
    tokens = jax.random.randint(kt, (B, T), 0, vocab_size, dtype=jnp.int32)

    logits = mingru_network_forward(tokens, params)
    logits = jax.block_until_ready(logits)

    ref = jax.block_until_ready(reference_forward(tokens, params))
    assert logits.shape == (B, T, vocab_size)
    assert jnp.allclose(logits, ref, atol=1e-4, rtol=1e-4), "mismatch vs JAX reference"

    print("KERNEL_OK")
</pallas_src>

<mosaic_0001>
module attributes {stable_mosaic.version = 11 : i64} {
  func.func @mingru_net_kernel(%arg0: i32, %arg1: i32, %arg2: memref<8x8x128xf32, #tpu.memory_space<vmem>>, %arg3: memref<1x128x128xf32, #tpu.memory_space<vmem>>, %arg4: memref<1x128x128xf32, #tpu.memory_space<vmem>>, %arg5: memref<1x128x128xf32, #tpu.memory_space<vmem>>, %arg6: memref<1x128x128xf32, #tpu.memory_space<vmem>>, %arg7: memref<1x1x128xf32, #tpu.memory_space<vmem>>, %arg8: memref<128x128xf32, #tpu.memory_space<vmem>>, %arg9: memref<1x128xf32, #tpu.memory_space<vmem>>, %arg10: memref<8x8x128xf32, #tpu.memory_space<vmem>>, %arg11: memref<64x128xf32, #tpu.memory_space<vmem>>, %arg12: memref<8x128xf32, #tpu.memory_space<vmem>>, %arg13: memref<64x128xf32, #tpu.memory_space<vmem>>, %arg14: memref<64x128xf32, #tpu.memory_space<vmem>>, %arg15: memref<64x128xf32, #tpu.memory_space<vmem>>) attributes {dimension_semantics = [#tpu.dimension_semantics<parallel>, #tpu.dimension_semantics<arbitrary>], iteration_bounds = array<i64: 1, 3>, scalar_prefetch = 0 : i64, scratch_operands = 5 : i64, tpu.core_type = #tpu.core_type<tc>, window_params = [{transform_indices = @transform_0, window_bounds = array<i64: 8, 8, 128>}, {transform_indices = @transform_1, window_bounds = array<i64: 1, 128, 128>}, {transform_indices = @transform_2, window_bounds = array<i64: 1, 128, 128>}, {transform_indices = @transform_3, window_bounds = array<i64: 1, 128, 128>}, {transform_indices = @transform_4, window_bounds = array<i64: 1, 128, 128>}, {transform_indices = @transform_5, window_bounds = array<i64: 1, 1, 128>}, {pipeline_mode = #tpu.pipeline_mode<synchronous>, transform_indices = @transform_6, window_bounds = array<i64: 128, 128>}, {pipeline_mode = #tpu.pipeline_mode<synchronous>, transform_indices = @transform_7, window_bounds = array<i64: 1, 128>}, {transform_indices = @transform_8, window_bounds = array<i64: 8, 8, 128>}]} {
    %c0_i32 = arith.constant 0 : i32
    %0 = arith.cmpi eq, %arg1, %c0_i32 : i32
    %1 = arith.extui %0 : i1 to i32
    %c0_i32_0 = arith.constant 0 : i32
    %2 = arith.cmpi ne, %1, %c0_i32_0 : i32
    scf.if %2 {
      %c0_72 = arith.constant 0 : index
      %c0_73 = arith.constant 0 : index
      %c0_74 = arith.constant 0 : index
      %128 = vector.load %arg2[%c0_72, %c0_73, %c0_74] : memref<8x8x128xf32, #tpu.memory_space<vmem>>, vector<8x8x128xf32>
      %129 = vector.shape_cast %128 : vector<8x8x128xf32> to vector<64x128xf32>
      %c0_75 = arith.constant 0 : index
      %c0_76 = arith.constant 0 : index
      %130 = vector.load %arg11[%c0_75, %c0_76] : memref<64x128xf32, #tpu.memory_space<vmem>>, vector<64x128xf32>
      tpu.vector_store %arg11[%c0_75, %c0_76], %129 {strides = array<i32>} : memref<64x128xf32, #tpu.memory_space<vmem>>, vector<64x128xf32>,
      %cst_77 = arith.constant 0.000000e+00 : f32
      %131 = vector.broadcast %cst_77 : f32 to vector<8x128xf32>
      %c0_78 = arith.constant 0 : index
      %c0_79 = arith.constant 0 : index
      %132 = vector.load %arg12[%c0_78, %c0_79] : memref<8x128xf32, #tpu.memory_space<vmem>>, vector<8x128xf32>
      tpu.vector_store %arg12[%c0_78, %c0_79], %131 {strides = array<i32>} : memref<8x128xf32, #tpu.memory_space<vmem>>, vector<8x128xf32>,
    } else {
    }
    %c0 = arith.constant 0 : index
    %c0_1 = arith.constant 0 : index
    %3 = vector.load %arg11[%c0, %c0_1] : memref<64x128xf32, #tpu.memory_space<vmem>>, vector<64x128xf32>
    %c0_2 = arith.constant 0 : index
    %c0_3 = arith.constant 0 : index
    %c0_4 = arith.constant 0 : index
    %4 = vector.load %arg3[%c0_2, %c0_3, %c0_4] : memref<1x128x128xf32, #tpu.memory_space<vmem>>, vector<1x128x128xf32>
    %5 = vector.shape_cast %4 : vector<1x128x128xf32> to vector<128x128xf32>
    %cst = arith.constant dense<0.000000e+00> : vector<64x128xf32>
    %6 = tpu.matmul %3, %5, %cst {dimension_numbers = #tpu.dot_dimension_numbers<[1], [0], [0], [1], [0, 0, 1, 1], [], []>} : vector<64x128xf32>, vector<128x128xf32>, vector<64x128xf32> -> vector<64x128xf32>
    %c0_5 = arith.constant 0 : index
    %c0_6 = arith.constant 0 : index
    %c0_7 = arith.constant 0 : index
    %7 = vector.load %arg4[%c0_5, %c0_6, %c0_7] : memref<1x128x128xf32, #tpu.memory_space<vmem>>, vector<1x128x128xf32>
    %8 = vector.shape_cast %7 : vector<1x128x128xf32> to vector<128x128xf32>
    %cst_8 = arith.constant dense<0.000000e+00> : vector<64x128xf32>
    %9 = tpu.matmul %3, %8, %cst_8 {dimension_numbers = #tpu.dot_dimension_numbers<[1], [0], [0], [1], [0, 0, 1, 1], [], []>} : vector<64x128xf32>, vector<128x128xf32>, vector<64x128xf32> -> vector<64x128xf32>
    %10 = arith.negf %9 : vector<64x128xf32>
    %11 = math.exp %10 : vector<64x128xf32>
    %cst_9 = arith.constant 1.000000e+00 : f32
    %12 = vector.broadcast %cst_9 : f32 to vector<64x128xf32>
    %13 = arith.addf %12, %11 : vector<64x128xf32>
    %14 = arith.divf %12, %13 : vector<64x128xf32>
    %cst_10 = arith.constant 1.000000e+00 : f32
    %15 = vector.broadcast %cst_10 : f32 to vector<64x128xf32>
    %16 = arith.subf %15, %14 : vector<64x128xf32>
    %c0_11 = arith.constant 0 : index
    %c0_12 = arith.constant 0 : index
    %17 = vector.load %arg13[%c0_11, %c0_12] : memref<64x128xf32, #tpu.memory_space<vmem>>, vector<64x128xf32>
    tpu.vector_store %arg13[%c0_11, %c0_12], %16 {strides = array<i32>} : memref<64x128xf32, #tpu.memory_space<vmem>>, vector<64x128xf32>,
    %cst_13 = arith.constant 0.000000e+00 : f32
    %18 = vector.broadcast %cst_13 : f32 to vector<64x128xf32>
    %19 = arith.cmpf oge, %6, %18 : vector<64x128xf32>
    %cst_14 = arith.constant 5.000000e-01 : f32
    %20 = vector.broadcast %cst_14 : f32 to vector<64x128xf32>
    %21 = arith.addf %6, %20 : vector<64x128xf32>
    %22 = arith.negf %6 : vector<64x128xf32>
    %23 = math.exp %22 : vector<64x128xf32>
    %cst_15 = arith.constant 1.000000e+00 : f32
    %24 = vector.broadcast %cst_15 : f32 to vector<64x128xf32>
    %25 = arith.addf %24, %23 : vector<64x128xf32>
    %26 = arith.divf %24, %25 : vector<64x128xf32>
    %27 = arith.select %19, %21, %26 : vector<64x128xi1>, vector<64x128xf32>
    %28 = arith.mulf %14, %27 : vector<64x128xf32>
    %c0_16 = arith.constant 0 : index
    %c0_17 = arith.constant 0 : index
    %29 = vector.load %arg14[%c0_16, %c0_17] : memref<64x128xf32, #tpu.memory_space<vmem>>, vector<64x128xf32>
    tpu.vector_store %arg14[%c0_16, %c0_17], %28 {strides = array<i32>} : memref<64x128xf32, #tpu.memory_space<vmem>>, vector<64x128xf32>,
    %c0_18 = arith.constant 0 : index
    %c0_19 = arith.constant 0 : index
    %30 = vector.load %arg12[%c0_18, %c0_19] : memref<8x128xf32, #tpu.memory_space<vmem>>, vector<8x128xf32>
    %c0_i32_20 = arith.constant 0 : i32
    %c8_i32 = arith.constant 8 : i32
    %31 = arith.muli %c0_i32_20, %c8_i32 : i32
    %32 = tpu.assume_multiple %31, 8 : i32
    %33 = arith.index_cast %32 : i32 to index
    %c0_21 = arith.constant 0 : index
    %34 = vector.load %arg13[%33, %c0_21] : memref<64x128xf32, #tpu.memory_space<vmem>>, vector<8x128xf32>
    %35 = arith.mulf %34, %30 : vector<8x128xf32>
    %36 = arith.index_cast %32 : i32 to index
    %c0_22 = arith.constant 0 : index
    %37 = vector.load %arg14[%36, %c0_22] : memref<64x128xf32, #tpu.memory_space<vmem>>, vector<8x128xf32>
    %38 = arith.addf %35, %37 : vector<8x128xf32>
    %39 = arith.index_cast %32 : i32 to index
    %c0_23 = arith.constant 0 : index
    %40 = vector.load %arg15[%39, %c0_23] : memref<64x128xf32, #tpu.memory_space<vmem>>, vector<8x128xf32>
    tpu.vector_store %arg15[%39, %c0_23], %38 {strides = array<i32>} : memref<64x128xf32, #tpu.memory_space<vmem>>, vector<8x128xf32>,
    %c1_i32 = arith.constant 1 : i32
    %c8_i32_24 = arith.constant 8 : i32
    %41 = arith.muli %c1_i32, %c8_i32_24 : i32
    %42 = tpu.assume_multiple %41, 8 : i32
    %43 = arith.index_cast %42 : i32 to index
    %c0_25 = arith.constant 0 : index
    %44 = vector.load %arg13[%43, %c0_25] : memref<64x128xf32, #tpu.memory_space<vmem>>, vector<8x128xf32>
    %45 = arith.mulf %44, %38 : vector<8x128xf32>
    %46 = arith.index_cast %42 : i32 to index
    %c0_26 = arith.constant 0 : index
    %47 = vector.load %arg14[%46, %c0_26] : memref<64x128xf32, #tpu.memory_space<vmem>>, vector<8x128xf32>
    %48 = arith.addf %45, %47 : vector<8x128xf32>
    %49 = arith.index_cast %42 : i32 to index
    %c0_27 = arith.constant 0 : index
    %50 = vector.load %arg15[%49, %c0_27] : memref<64x128xf32, #tpu.memory_space<vmem>>, vector<8x128xf32>
    tpu.vector_store %arg15[%49, %c0_27], %48 {strides = array<i32>} : memref<64x128xf32, #tpu.memory_space<vmem>>, vector<8x128xf32>,
    %c2_i32 = arith.constant 2 : i32
    %c8_i32_28 = arith.constant 8 : i32
    %51 = arith.muli %c2_i32, %c8_i32_28 : i32
    %52 = tpu.assume_multiple %51, 8 : i32
    %53 = arith.index_cast %52 : i32 to index
    %c0_29 = arith.constant 0 : index
    %54 = vector.load %arg13[%53, %c0_29] : memref<64x128xf32, #tpu.memory_space<vmem>>, vector<8x128xf32>
    %55 = arith.mulf %54, %48 : vector<8x128xf32>
    %56 = arith.index_cast %52 : i32 to index
    %c0_30 = arith.constant 0 : index
    %57 = vector.load %arg14[%56, %c0_30] : memref<64x128xf32, #tpu.memory_space<vmem>>, vector<8x128xf32>
    %58 = arith.addf %55, %57 : vector<8x128xf32>
    %59 = arith.index_cast %52 : i32 to index
    %c0_31 = arith.constant 0 : index
    %60 = vector.load %arg15[%59, %c0_31] : memref<64x128xf32, #tpu.memory_space<vmem>>, vector<8x128xf32>
    tpu.vector_store %arg15[%59, %c0_31], %58 {strides = array<i32>} : memref<64x128xf32, #tpu.memory_space<vmem>>, vector<8x128xf32>,
    %c3_i32 = arith.constant 3 : i32
    %c8_i32_32 = arith.constant 8 : i32
    %61 = arith.muli %c3_i32, %c8_i32_32 : i32
    %62 = tpu.assume_multiple %61, 8 : i32
    %63 = arith.index_cast %62 : i32 to index
    %c0_33 = arith.constant 0 : index
    %64 = vector.load %arg13[%63, %c0_33] : memref<64x128xf32, #tpu.memory_space<vmem>>, vector<8x128xf32>
    %65 = arith.mulf %64, %58 : vector<8x128xf32>
    %66 = arith.index_cast %62 : i32 to index
    %c0_34 = arith.constant 0 : index
    %67 = vector.load %arg14[%66, %c0_34] : memref<64x128xf32, #tpu.memory_space<vmem>>, vector<8x128xf32>
    %68 = arith.addf %65, %67 : vector<8x128xf32>
    %69 = arith.index_cast %62 : i32 to index
    %c0_35 = arith.constant 0 : index
    %70 = vector.load %arg15[%69, %c0_35] : memref<64x128xf32, #tpu.memory_space<vmem>>, vector<8x128xf32>
    tpu.vector_store %arg15[%69, %c0_35], %68 {strides = array<i32>} : memref<64x128xf32, #tpu.memory_space<vmem>>, vector<8x128xf32>,
    %c4_i32 = arith.constant 4 : i32
    %c8_i32_36 = arith.constant 8 : i32
    %71 = arith.muli %c4_i32, %c8_i32_36 : i32
    %72 = tpu.assume_multiple %71, 8 : i32
    %73 = arith.index_cast %72 : i32 to index
    %c0_37 = arith.constant 0 : index
    %74 = vector.load %arg13[%73, %c0_37] : memref<64x128xf32, #tpu.memory_space<vmem>>, vector<8x128xf32>
    %75 = arith.mulf %74, %68 : vector<8x128xf32>
    %76 = arith.index_cast %72 : i32 to index
    %c0_38 = arith.constant 0 : index
    %77 = vector.load %arg14[%76, %c0_38] : memref<64x128xf32, #tpu.memory_space<vmem>>, vector<8x128xf32>
    %78 = arith.addf %75, %77 : vector<8x128xf32>
    %79 = arith.index_cast %72 : i32 to index
    %c0_39 = arith.constant 0 : index
    %80 = vector.load %arg15[%79, %c0_39] : memref<64x128xf32, #tpu.memory_space<vmem>>, vector<8x128xf32>
    tpu.vector_store %arg15[%79, %c0_39], %78 {strides = array<i32>} : memref<64x128xf32, #tpu.memory_space<vmem>>, vector<8x128xf32>,
    %c5_i32 = arith.constant 5 : i32
    %c8_i32_40 = arith.constant 8 : i32
    %81 = arith.muli %c5_i32, %c8_i32_40 : i32
    %82 = tpu.assume_multiple %81, 8 : i32
    %83 = arith.index_cast %82 : i32 to index
    %c0_41 = arith.constant 0 : index
    %84 = vector.load %arg13[%83, %c0_41] : memref<64x128xf32, #tpu.memory_space<vmem>>, vector<8x128xf32>
    %85 = arith.mulf %84, %78 : vector<8x128xf32>
    %86 = arith.index_cast %82 : i32 to index
    %c0_42 = arith.constant 0 : index
    %87 = vector.load %arg14[%86, %c0_42] : memref<64x128xf32, #tpu.memory_space<vmem>>, vector<8x128xf32>
    %88 = arith.addf %85, %87 : vector<8x128xf32>
    %89 = arith.index_cast %82 : i32 to index
    %c0_43 = arith.constant 0 : index
    %90 = vector.load %arg15[%89, %c0_43] : memref<64x128xf32, #tpu.memory_space<vmem>>, vector<8x128xf32>
    tpu.vector_store %arg15[%89, %c0_43], %88 {strides = array<i32>} : memref<64x128xf32, #tpu.memory_space<vmem>>, vector<8x128xf32>,
    %c6_i32 = arith.constant 6 : i32
    %c8_i32_44 = arith.constant 8 : i32
    %91 = arith.muli %c6_i32, %c8_i32_44 : i32
    %92 = tpu.assume_multiple %91, 8 : i32
    %93 = arith.index_cast %92 : i32 to index
    %c0_45 = arith.constant 0 : index
    %94 = vector.load %arg13[%93, %c0_45] : memref<64x128xf32, #tpu.memory_space<vmem>>, vector<8x128xf32>
    %95 = arith.mulf %94, %88 : vector<8x128xf32>
    %96 = arith.index_cast %92 : i32 to index
    %c0_46 = arith.constant 0 : index
    %97 = vector.load %arg14[%96, %c0_46] : memref<64x128xf32, #tpu.memory_space<vmem>>, vector<8x128xf32>
    %98 = arith.addf %95, %97 : vector<8x128xf32>
    %99 = arith.index_cast %92 : i32 to index
    %c0_47 = arith.constant 0 : index
    %100 = vector.load %arg15[%99, %c0_47] : memref<64x128xf32, #tpu.memory_space<vmem>>, vector<8x128xf32>
    tpu.vector_store %arg15[%99, %c0_47], %98 {strides = array<i32>} : memref<64x128xf32, #tpu.memory_space<vmem>>, vector<8x128xf32>,
    %c7_i32 = arith.constant 7 : i32
    %c8_i32_48 = arith.constant 8 : i32
    %101 = arith.muli %c7_i32, %c8_i32_48 : i32
    %102 = tpu.assume_multiple %101, 8 : i32
    %103 = arith.index_cast %102 : i32 to index
    %c0_49 = arith.constant 0 : index
    %104 = vector.load %arg13[%103, %c0_49] : memref<64x128xf32, #tpu.memory_space<vmem>>, vector<8x128xf32>
    %105 = arith.mulf %104, %98 : vector<8x128xf32>
    %106 = arith.index_cast %102 : i32 to index
    %c0_50 = arith.constant 0 : index
    %107 = vector.load %arg14[%106, %c0_50] : memref<64x128xf32, #tpu.memory_space<vmem>>, vector<8x128xf32>
    %108 = arith.addf %105, %107 : vector<8x128xf32>
    %109 = arith.index_cast %102 : i32 to index
    %c0_51 = arith.constant 0 : index
    %110 = vector.load %arg15[%109, %c0_51] : memref<64x128xf32, #tpu.memory_space<vmem>>, vector<8x128xf32>
    tpu.vector_store %arg15[%109, %c0_51], %108 {strides = array<i32>} : memref<64x128xf32, #tpu.memory_space<vmem>>, vector<8x128xf32>,
    %c8_i32_52 = arith.constant 8 : i32
    %c0_53 = arith.constant 0 : index
    %c0_54 = arith.constant 0 : index
    %111 = vector.load %arg12[%c0_53, %c0_54] : memref<8x128xf32, #tpu.memory_space<vmem>>, vector<8x128xf32>
    tpu.vector_store %arg12[%c0_53, %c0_54], %108 {strides = array<i32>} : memref<8x128xf32, #tpu.memory_space<vmem>>, vector<8x128xf32>,
    %c0_55 = arith.constant 0 : index
    %c0_56 = arith.constant 0 : index
    %112 = vector.load %arg15[%c0_55, %c0_56] : memref<64x128xf32, #tpu.memory_space<vmem>>, vector<64x128xf32>
    %c0_57 = arith.constant 0 : index
    %c0_58 = arith.constant 0 : index
    %c0_59 = arith.constant 0 : index
    %113 = vector.load %arg5[%c0_57, %c0_58, %c0_59] : memref<1x128x128xf32, #tpu.memory_space<vmem>>, vector<1x128x128xf32>
    %114 = vector.shape_cast %113 : vector<1x128x128xf32> to vector<128x128xf32>
    %cst_60 = arith.constant dense<0.000000e+00> : vector<64x128xf32>
    %115 = tpu.matmul %112, %114, %cst_60 {dimension_numbers = #tpu.dot_dimension_numbers<[1], [0], [0], [1], [0, 0, 1, 1], [], []>} : vector<64x128xf32>, vector<128x128xf32>, vector<64x128xf32> -> vector<64x128xf32>
    %c0_61 = arith.constant 0 : index
    %c0_62 = arith.constant 0 : index
    %c0_63 = arith.constant 0 : index
    %116 = vector.load %arg6[%c0_61, %c0_62, %c0_63] : memref<1x128x128xf32, #tpu.memory_space<vmem>>, vector<1x128x128xf32>
    %117 = vector.shape_cast %116 : vector<1x128x128xf32> to vector<128x128xf32>
    %cst_64 = arith.constant dense<0.000000e+00> : vector<64x128xf32>
    %118 = tpu.matmul %115, %117, %cst_64 {dimension_numbers = #tpu.dot_dimension_numbers<[1], [0], [0], [1], [0, 0, 1, 1], [], []>} : vector<64x128xf32>, vector<128x128xf32>, vector<64x128xf32> -> vector<64x128xf32>
    %c0_65 = arith.constant 0 : index
    %c0_66 = arith.constant 0 : index
    %c0_67 = arith.constant 0 : index
    %119 = vector.load %arg7[%c0_65, %c0_66, %c0_67] : memref<1x1x128xf32, #tpu.memory_space<vmem>>, vector<1x1x128xf32>
    %120 = vector.shape_cast %119 : vector<1x1x128xf32> to vector<1x128xf32>
    %121 = vector.broadcast %120 : vector<1x128xf32> to vector<64x128xf32>
    %122 = arith.addf %118, %121 : vector<64x128xf32>
    %123 = arith.addf %122, %3 : vector<64x128xf32>
    %c0_68 = arith.constant 0 : index
    %c0_69 = arith.constant 0 : index
    %124 = vector.load %arg11[%c0_68, %c0_69] : memref<64x128xf32, #tpu.memory_space<vmem>>, vector<64x128xf32>
    tpu.vector_store %arg11[%c0_68, %c0_69], %123 {strides = array<i32>} : memref<64x128xf32, #tpu.memory_space<vmem>>, vector<64x128xf32>,
    %c2_i32_70 = arith.constant 2 : i32
    %125 = arith.cmpi eq, %arg1, %c2_i32_70 : i32
    %126 = arith.extui %125 : i1 to i32
    %c0_i32_71 = arith.constant 0 : i32
    %127 = arith.cmpi ne, %126, %c0_i32_71 : i32
    scf.if %127 {
      %c0_72 = arith.constant 0 : index
      %c0_73 = arith.constant 0 : index
      %128 = vector.load %arg8[%c0_72, %c0_73] : memref<128x128xf32, #tpu.memory_space<vmem>>, vector<128x128xf32>
      %cst_74 = arith.constant dense<0.000000e+00> : vector<64x128xf32>
      %129 = tpu.matmul %123, %128, %cst_74 {dimension_numbers = #tpu.dot_dimension_numbers<[1], [0], [0], [1], [0, 0, 1, 1], [], []>} : vector<64x128xf32>, vector<128x128xf32>, vector<64x128xf32> -> vector<64x128xf32>
      %c0_75 = arith.constant 0 : index
      %c0_76 = arith.constant 0 : index
      %130 = vector.load %arg9[%c0_75, %c0_76] : memref<1x128xf32, #tpu.memory_space<vmem>>, vector<1x128xf32>
      %131 = vector.broadcast %130 : vector<1x128xf32> to vector<64x128xf32>
      %132 = arith.addf %129, %131 : vector<64x128xf32>
      %133 = vector.shape_cast %132 : vector<64x128xf32> to vector<8x8x128xf32>
      %c0_77 = arith.constant 0 : index
      %c0_78 = arith.constant 0 : index
      %c0_79 = arith.constant 0 : index
      %134 = vector.load %arg10[%c0_77, %c0_78, %c0_79] : memref<8x8x128xf32, #tpu.memory_space<vmem>>, vector<8x8x128xf32>
      tpu.vector_store %arg10[%c0_77, %c0_78, %c0_79], %133 {strides = array<i32>} : memref<8x8x128xf32, #tpu.memory_space<vmem>>, vector<8x8x128xf32>,
    } else {
    }
    return
  }
  func.func @transform_0(%arg0: i32, %arg1: i32) -> (i32, i32, i32) {
    %c0_i32 = arith.constant 0 : i32
    %c0_i32_0 = arith.constant 0 : i32
    %c0_i32_1 = arith.constant 0 : i32
    return %c0_i32, %arg0, %c0_i32_0 : i32, i32, i32
  }
  func.func @transform_1(%arg0: i32, %arg1: i32) -> (i32, i32, i32) {
    %c0_i32 = arith.constant 0 : i32
    %c0_i32_0 = arith.constant 0 : i32
    %c0_i32_1 = arith.constant 0 : i32
    return %arg1, %c0_i32, %c0_i32_0 : i32, i32, i32
  }
  func.func @transform_2(%arg0: i32, %arg1: i32) -> (i32, i32, i32) {
    %c0_i32 = arith.constant 0 : i32
    %c0_i32_0 = arith.constant 0 : i32
    %c0_i32_1 = arith.constant 0 : i32
    return %arg1, %c0_i32, %c0_i32_0 : i32, i32, i32
  }
  func.func @transform_3(%arg0: i32, %arg1: i32) -> (i32, i32, i32) {
    %c0_i32 = arith.constant 0 : i32
    %c0_i32_0 = arith.constant 0 : i32
    %c0_i32_1 = arith.constant 0 : i32
    return %arg1, %c0_i32, %c0_i32_0 : i32, i32, i32
  }
  func.func @transform_4(%arg0: i32, %arg1: i32) -> (i32, i32, i32) {
    %c0_i32 = arith.constant 0 : i32
    %c0_i32_0 = arith.constant 0 : i32
    %c0_i32_1 = arith.constant 0 : i32
    return %arg1, %c0_i32, %c0_i32_0 : i32, i32, i32
  }
  func.func @transform_5(%arg0: i32, %arg1: i32) -> (i32, i32, i32) {
    %c0_i32 = arith.constant 0 : i32
    %c0_i32_0 = arith.constant 0 : i32
    %c0_i32_1 = arith.constant 0 : i32
    return %arg1, %c0_i32, %c0_i32_0 : i32, i32, i32
  }
  func.func @transform_6(%arg0: i32, %arg1: i32) -> (i32, i32) {
    %c0_i32 = arith.constant 0 : i32
    %c0_i32_0 = arith.constant 0 : i32
    %c0_i32_1 = arith.constant 0 : i32
    return %c0_i32, %c0_i32_0 : i32, i32
  }
  func.func @transform_7(%arg0: i32, %arg1: i32) -> (i32, i32) {
    %c0_i32 = arith.constant 0 : i32
    %c0_i32_0 = arith.constant 0 : i32
    %c0_i32_1 = arith.constant 0 : i32
    return %c0_i32, %c0_i32_0 : i32, i32
  }
  func.func @transform_8(%arg0: i32, %arg1: i32) -> (i32, i32, i32) {
    %c0_i32 = arith.constant 0 : i32
    %c0_i32_0 = arith.constant 0 : i32
    %c0_i32_1 = arith.constant 0 : i32
    return %c0_i32, %arg0, %c0_i32_0 : i32, i32, i32
  }
}

</mosaic_0001>

<llo_original>
// kernel: tpu_custom_call.1
$region0: #{tpu_custom_call.1}
  #allocation0 [shape = 'u32[]', space=smem, size = 0x4, offset = 0x4, fixed_abs, tag = 'smem constant byte address 0x4 - core index']
  #allocation1 [shape = 'u32[72,128]{1,0:T(1,128)}', space=vmem, size = 0x9000, scoped, tag = 'internal scratch']
  #allocation2 [shape = 'f32[64,128]{1,0:T(8,128)}', space=vmem, size = 0x8000, scoped, tag = 'scratch operand']
  #allocation3 [shape = 'f32[8,128]{1,0:T(8,128)}', space=vmem, size = 0x1000, scoped, tag = 'scratch operand']
  #allocation4 [shape = 'f32[64,128]{1,0:T(8,128)}', space=vmem, size = 0x8000, scoped, tag = 'scratch operand']
  #allocation5 [shape = 'f32[64,128]{1,0:T(8,128)}', space=vmem, size = 0x8000, scoped, tag = 'scratch operand']
  #allocation6 [shape = 'f32[64,128]{1,0:T(8,128)}', space=vmem, size = 0x8000, scoped, tag = 'scratch operand']
  %s0 = inlined_call_operand.hbm [shape: f32[8,8,128], index: 0, kind: input, shape index: {}]
  %s1 = inlined_call_operand.hbm [shape: f32[3,128,128], index: 1, kind: input, shape index: {}]
  %s2 = inlined_call_operand.hbm [shape: f32[3,128,128], index: 2, kind: input, shape index: {}]
  %s3 = inlined_call_operand.hbm [shape: f32[3,128,128], index: 3, kind: input, shape index: {}]
  %s4 = inlined_call_operand.hbm [shape: f32[3,128,128], index: 4, kind: input, shape index: {}]
  %s5 = inlined_call_operand.vmem [shape: f32[3,1,128], index: 5, kind: input, shape index: {}]
  %s6 = inlined_call_operand.hbm [shape: f32[128,128], index: 6, kind: input, shape index: {}]
  %s7 = inlined_call_operand.vmem [shape: f32[1,128], index: 7, kind: input, shape index: {}]
  %s8 = inlined_call_operand.hbm [shape: f32[8,8,128], index: 8, kind: output, shape index: {}]
  %s9 = sld [smem:[#allocation0]]
  $region97: #{tpu_custom_call.1} parent=0
    _
  %s11 = ssub.s32 1, %s9
  %s12 = scalar_select 0, %s11, %s9
  $region1: #{tpu_custom_call.1} parent=0
    #allocation7 [shape = 'u8[32768]{0}', space=vmem, size = 0x8000, scoped, tag = 'input window, operand 0, single buffered']
    #allocation8 [shape = 's32[2]{0}', space=sflag, size = 0x8, scoped, tag = 'scoped memory for tpu_custom_call.1']
    #allocation9 [shape = 's32[2]{0}', space=sflag, size = 0x8, scoped, tag = 'scoped memory for tpu_custom_call.1']
    #allocation10 [shape = 'u8[131072]{0}', space=vmem, size = 0x20000, scoped, tag = 'input window, operand 1']
    #allocation11 [shape = 's32[2]{0}', space=sflag, size = 0x8, scoped, tag = 'scoped memory for tpu_custom_call.1']
    #allocation12 [shape = 'u8[131072]{0}', space=vmem, size = 0x20000, scoped, tag = 'input window, operand 2']
    #allocation13 [shape = 'u8[131072]{0}', space=vmem, size = 0x20000, scoped, tag = 'input window, operand 3']
    #allocation14 [shape = 's32[2]{0}', space=sflag, size = 0x8, scoped, tag = 'scoped memory for tpu_custom_call.1']
    #allocation15 [shape = 'u8[131072]{0}', space=vmem, size = 0x20000, scoped, tag = 'input window, operand 4']
    #allocation16 [shape = 'u8[65536]{0}', space=vmem, size = 0x10000, scoped, tag = 'input window, operand 6, single buffered']
    #allocation17 [shape = 's32[1]{0}', space=sflag, size = 0x4, scoped, tag = 'scoped memory for tpu_custom_call.1']
    #allocation18 [shape = 'u8[32768]{0}', space=vmem, size = 0x8000, scoped, tag = 'output window, operand 0, single buffered']
    %13 = vsyncpa [#allocation8], 0
    %14 = vsyncpa [#allocation11], 0
    %s15 = scalar_lea.sflag [#allocation11], 1
    %16 = vsyncpa %s15, 0
    %17 = vsyncpa [#allocation14], 0
    %s18 = scalar_lea.sflag [#allocation14], 1
    %19 = vsyncpa %s18, 0
    %20 = vsyncpa [#allocation17], 0
    %21 = vsyncpa [#allocation9], 0
    loop: start=0, step=1, limit=5
    $region2: #{tpu_custom_call.1} parent=1 // loop_pre_header
      _
    $region3: #{tpu_custom_call.1} parent=1 // loop_header
      %s23 = sphi 0, %s27
      %p24 = scmp.ge.s32.totalorder %s23, 5
      %s30 = sphi 0, %s42
      %s31 = sphi 0, %s38
      %s32 = sphi 0, %s30
      %s33 = sphi 0, %s31
      %s34 = sphi 0, %s32
      %s35 = sphi 0, %s33
      %s45 = sphi 0, %s47
      %s48 = sphi 0, %s45
      %s49 = sphi 0, %s48
      %s65 = sphi 0, %s49
      %s71 = sphi 0, %s73
      %s74 = sphi 0, %s71
      %s75 = sphi 0, %s74
      %s91 = sphi 0, %s75
      %s97 = sphi 0, %s99
      %s100 = sphi 0, %s97
      %s101 = sphi 0, %s100
      %s117 = sphi 0, %s101
      %s123 = sphi 0, %s125
      %s126 = sphi 0, %s123
      %s127 = sphi 0, %s126
      %s143 = sphi 0, %s127
      %s149 = sphi 0, %s151
      %s152 = sphi 0, %s149
      %s153 = sphi 0, %s152
      %s169 = sphi 0, %s153
      %s175 = sphi 0, %s177
      %s178 = sphi 0, %s175
      %s179 = sphi 0, %s178
      %s195 = sphi 0, %s179
      %s199 = sphi 0, %s199
      %s201 = sphi 0, %s199
      %s202 = sphi 0, %s201
      %s216 = sphi 0, %s202
      %s220 = sphi 0, %s220
      %s222 = sphi 0, %s220
      %s223 = sphi 0, %s222
      %s237 = sphi 0, %s223
      %s243 = sphi 0, %s245
      %s246 = sphi 0, %s243
      %s247 = sphi 0, %s246
      %s263 = sphi 0, %s247
    $region4: #{tpu_custom_call.1} parent=1 // loop_header_branch
      %26 = sbr.rel (%p24) target = $region8
    $region5: #{tpu_custom_call.1} parent=1 // loop_body
      %s28 = ssub.s32 %s23, 1
      %s29 = ssub.s32 %s23, 2
      %s36 = sadd.s32 1, %s31
      %p37 = scmp.ge.s32.totalorder %s36, 3
      %s38 = scalar_select %p37, 0, %s36
      %s39 = sadd.s32 1, %s30
      %s40 = scalar_select %p37, %s39, %s30
      %p41 = scmp.ge.s32.totalorder %s40, 1
      %s42 = scalar_select %p41, 0, %s40
      %s43 = ssub.s32 %s30, %s42
      %p44 = scmp.eq.s32.totalorder %s43, 0
      %s46 = sadd.s32 %s45, 1
      %s47 = scalar_select %p44, %s45, %s46
      %p50 = pneg %p44
      %p51 = scmp.eq.s32.totalorder %s23, 2
      %p52 = por %p50, %p51
      %p53 = scmp.ne.s32.totalorder %s45, %s48
      %p54 = scmp.eq.s32.totalorder %s23, 0
      %p55 = por %p53, %p54
      %p56 = scmp.ne.s32.totalorder %s45, %s48
      %p57 = scmp.eq.s32.totalorder %s28, 2
      %p58 = por %p56, %p57
      %p59 = scmp.ne.s32.totalorder %s48, %s49
      %p60 = scmp.eq.s32.totalorder %s28, 0
      %p61 = por %p59, %p60
      %p62 = scmp.ne.s32.totalorder %s48, %s49
      %p63 = scmp.eq.s32.totalorder %s29, 2
      %p64 = por %p62, %p63
      %p66 = scmp.ne.s32.totalorder %s49, %s65
      %p67 = scmp.eq.s32.totalorder %s29, 0
      %p68 = por %p66, %p67
      %s69 = ssub.s32 %s31, %s38
      %p70 = scmp.eq.s32.totalorder %s69, 0
      %s72 = sadd.s32 %s71, 1
      %s73 = scalar_select %p70, %s71, %s72
      %p76 = pneg %p70
      %p77 = scmp.eq.s32.totalorder %s23, 2
      %p78 = por %p76, %p77
      %p79 = scmp.ne.s32.totalorder %s71, %s74
      %p80 = scmp.eq.s32.totalorder %s23, 0
      %p81 = por %p79, %p80
      %p82 = scmp.ne.s32.totalorder %s71, %s74
      %p83 = scmp.eq.s32.totalorder %s28, 2
      %p84 = por %p82, %p83
      %p85 = scmp.ne.s32.totalorder %s74, %s75
      %p86 = scmp.eq.s32.totalorder %s28, 0
      %p87 = por %p85, %p86
      %p88 = scmp.ne.s32.totalorder %s74, %s75
      %p89 = scmp.eq.s32.totalorder %s29, 2
      %p90 = por %p88, %p89
      %p92 = scmp.ne.s32.totalorder %s75, %s91
      %p93 = scmp.eq.s32.totalorder %s29, 0
      %p94 = por %p92, %p93
      %s95 = ssub.s32 %s31, %s38
      %p96 = scmp.eq.s32.totalorder %s95, 0
      %s98 = sadd.s32 %s97, 1
      %s99 = scalar_select %p96, %s97, %s98
      %p102 = pneg %p96
      %p103 = scmp.eq.s32.totalorder %s23, 2
      %p104 = por %p102, %p103
      %p105 = scmp.ne.s32.totalorder %s97, %s100
      %p106 = scmp.eq.s32.totalorder %s23, 0
      %p107 = por %p105, %p106
      %p108 = scmp.ne.s32.totalorder %s97, %s100
      %p109 = scmp.eq.s32.totalorder %s28, 2
      %p110 = por %p108, %p109
      %p111 = scmp.ne.s32.totalorder %s100, %s101
      %p112 = scmp.eq.s32.totalorder %s28, 0
      %p113 = por %p111, %p112
      %p114 = scmp.ne.s32.totalorder %s100, %s101
      %p115 = scmp.eq.s32.totalorder %s29, 2
      %p116 = por %p114, %p115
      %p118 = scmp.ne.s32.totalorder %s101, %s117
      %p119 = scmp.eq.s32.totalorder %s29, 0
      %p120 = por %p118, %p119
      %s121 = ssub.s32 %s31, %s38
      %p122 = scmp.eq.s32.totalorder %s121, 0
      %s124 = sadd.s32 %s123, 1
      %s125 = scalar_select %p122, %s123, %s124
      %p128 = pneg %p122
      %p129 = scmp.eq.s32.totalorder %s23, 2
      %p130 = por %p128, %p129
      %p131 = scmp.ne.s32.totalorder %s123, %s126
      %p132 = scmp.eq.s32.totalorder %s23, 0
      %p133 = por %p131, %p132
      %p134 = scmp.ne.s32.totalorder %s123, %s126
      %p135 = scmp.eq.s32.totalorder %s28, 2
      %p136 = por %p134, %p135
      %p137 = scmp.ne.s32.totalorder %s126, %s127
      %p138 = scmp.eq.s32.totalorder %s28, 0
      %p139 = por %p137, %p138
      %p140 = scmp.ne.s32.totalorder %s126, %s127
      %p141 = scmp.eq.s32.totalorder %s29, 2
      %p142 = por %p140, %p141
      %p144 = scmp.ne.s32.totalorder %s127, %s143
      %p145 = scmp.eq.s32.totalorder %s29, 0
      %p146 = por %p144, %p145
      %s147 = ssub.s32 %s31, %s38
      %p148 = scmp.eq.s32.totalorder %s147, 0
      %s150 = sadd.s32 %s149, 1
      %s151 = scalar_select %p148, %s149, %s150
      %p154 = pneg %p148
      %p155 = scmp.eq.s32.totalorder %s23, 2
      %p156 = por %p154, %p155
      %p157 = scmp.ne.s32.totalorder %s149, %s152
      %p158 = scmp.eq.s32.totalorder %s23, 0
      %p159 = por %p157, %p158
      %p160 = scmp.ne.s32.totalorder %s149, %s152
      %p161 = scmp.eq.s32.totalorder %s28, 2
      %p162 = por %p160, %p161
      %p163 = scmp.ne.s32.totalorder %s152, %s153
      %p164 = scmp.eq.s32.totalorder %s28, 0
      %p165 = por %p163, %p164
      %p166 = scmp.ne.s32.totalorder %s152, %s153
      %p167 = scmp.eq.s32.totalorder %s29, 2
      %p168 = por %p166, %p167
      %p170 = scmp.ne.s32.totalorder %s153, %s169
      %p171 = scmp.eq.s32.totalorder %s29, 0
      %p172 = por %p170, %p171
      %s173 = ssub.s32 %s31, %s38
      %p174 = scmp.eq.s32.totalorder %s173, 0
      %s176 = sadd.s32 %s175, 1
      %s177 = scalar_select %p174, %s175, %s176
      %p180 = pneg %p174
      %p181 = scmp.eq.s32.totalorder %s23, 2
      %p182 = por %p180, %p181
      %p183 = scmp.ne.s32.totalorder %s175, %s178
      %p184 = scmp.eq.s32.totalorder %s23, 0
      %p185 = por %p183, %p184
      %p186 = scmp.ne.s32.totalorder %s175, %s178
      %p187 = scmp.eq.s32.totalorder %s28, 2
      %p188 = por %p186, %p187
      %p189 = scmp.ne.s32.totalorder %s178, %s179
      %p190 = scmp.eq.s32.totalorder %s28, 0
      %p191 = por %p189, %p190
      %p192 = scmp.ne.s32.totalorder %s178, %s179
      %p193 = scmp.eq.s32.totalorder %s29, 2
      %p194 = por %p192, %p193
      %p196 = scmp.ne.s32.totalorder %s179, %s195
      %p197 = scmp.eq.s32.totalorder %s29, 0
      %p198 = por %p196, %p197
      %s200 = sadd.s32 %s199, 1
      %p203 = scmp.eq.s32.totalorder %s23, 2
      %p204 = scmp.ne.s32.totalorder %s199, %s201
      %p205 = scmp.eq.s32.totalorder %s23, 0
      %p206 = por %p204, %p205
      %p207 = scmp.ne.s32.totalorder %s199, %s201
      %p208 = scmp.eq.s32.totalorder %s28, 2
      %p209 = por %p207, %p208
      %p210 = scmp.ne.s32.totalorder %s201, %s202
      %p211 = scmp.eq.s32.totalorder %s28, 0
      %p212 = por %p210, %p211
      %p213 = scmp.ne.s32.totalorder %s201, %s202
      %p214 = scmp.eq.s32.totalorder %s29, 2
      %p215 = por %p213, %p214
      %p217 = scmp.ne.s32.totalorder %s202, %s216
      %p218 = scmp.eq.s32.totalorder %s29, 0
      %p219 = por %p217, %p218
      %s221 = sadd.s32 %s220, 1
      %p224 = scmp.eq.s32.totalorder %s23, 2
      %p225 = scmp.ne.s32.totalorder %s220, %s222
      %p226 = scmp.eq.s32.totalorder %s23, 0
      %p227 = por %p225, %p226
      %p228 = scmp.ne.s32.totalorder %s220, %s222
      %p229 = scmp.eq.s32.totalorder %s28, 2
      %p230 = por %p228, %p229
      %p231 = scmp.ne.s32.totalorder %s222, %s223
      %p232 = scmp.eq.s32.totalorder %s28, 0
      %p233 = por %p231, %p232
      %p234 = scmp.ne.s32.totalorder %s222, %s223
      %p235 = scmp.eq.s32.totalorder %s29, 2
      %p236 = por %p234, %p235
      %p238 = scmp.ne.s32.totalorder %s223, %s237
      %p239 = scmp.eq.s32.totalorder %s29, 0
      %p240 = por %p238, %p239
      %s241 = ssub.s32 %s30, %s42
      %p242 = scmp.eq.s32.totalorder %s241, 0
      %s244 = sadd.s32 %s243, 1
      %s245 = scalar_select %p242, %s243, %s244
      %p248 = pneg %p242
      %p249 = scmp.eq.s32.totalorder %s23, 2
      %p250 = por %p248, %p249
      %p251 = scmp.ne.s32.totalorder %s243, %s246
      %p252 = scmp.eq.s32.totalorder %s23, 0
      %p253 = por %p251, %p252
      %p254 = scmp.ne.s32.totalorder %s243, %s246
      %p255 = scmp.eq.s32.totalorder %s28, 2
      %p256 = por %p254, %p255
      %p257 = scmp.ne.s32.totalorder %s246, %s247
      %p258 = scmp.eq.s32.totalorder %s28, 0
      %p259 = por %p257, %p258
      %p260 = scmp.ne.s32.totalorder %s246, %s247
      %p261 = scmp.eq.s32.totalorder %s29, 2
      %p262 = por %p260, %p261
      %p264 = scmp.ne.s32.totalorder %s247, %s263
      %p265 = scmp.eq.s32.totalorder %s29, 0
      %p266 = por %p264, %p265
      %p267 = scmp.le.s32.totalorder 1, %s23
      %p268 = scmp.lt.s32.totalorder %s23, 4
      %p269 = pnand %p267, %p268
      %p270 = pneg %p269
      // Predicated region
      $region9: #{tpu_custom_call.1} parent=5 // pred_check
        _
      $region10: #{tpu_custom_call.1} parent=5 // pred_check_branch
        %272 = sbr.rel (%p269) target = $region12
      $region11: #{tpu_custom_call.1} parent=5 // pred_region
        %s273 = ssub.s32 %s23, 1
        // Predicated region
        $region13: #{tpu_custom_call.1} parent=11 // pred_check
          %p274 = pneg %p61
        $region14: #{tpu_custom_call.1} parent=11 // pred_check_branch
          %276 = sbr.rel (%p274) target = $region16
        $region15: #{tpu_custom_call.1} parent=11 // pred_region
          %278 = vsyncadd [#allocation8], 0
          %s279 = smul.addr %s32, 8
          %s280 = scalar_lea.hbm %s0, %s279
          %s281 = sshll.u32 %s280, 4
          %s282 = int_to_ptr.hbm [resolvable:$true] %s281
          %s283 = sshll.u32 [#allocation7], 4
          %s284 = int_to_ptr.vmem [resolvable:$true] %s283
          %289 = dma.hbm_to_vmem [thread:$0]  %s282, 1024, %s284, [#allocation8], 128, 128, 8
        $region16: #{tpu_custom_call.1} parent=11 // pred_fallthru
          _
        // Predicated region
        $region17: #{tpu_custom_call.1} parent=11 // pred_check
          %p290 = pneg %p212
        $region18: #{tpu_custom_call.1} parent=11 // pred_check_branch
          %292 = sbr.rel (%p290) target = $region20
        $region19: #{tpu_custom_call.1} parent=11 // pred_region
          %294 = vsyncadd [#allocation17], 0
          %s295 = sshll.u32 %s6, 4
          %s296 = int_to_ptr.hbm [resolvable:$true] %s295
          %s297 = sshll.u32 [#allocation16], 4
          %s298 = int_to_ptr.vmem [resolvable:$true] %s297
          %303 = dma.hbm_to_vmem [thread:$0]  %s296, 2048, %s298, [#allocation17], 128, 128, 8
        $region20: #{tpu_custom_call.1} parent=11 // pred_fallthru
          _
        // Predicated region
        $region21: #{tpu_custom_call.1} parent=11 // pred_check
          %p304 = pneg %p233
        $region22: #{tpu_custom_call.1} parent=11 // pred_check_branch
          %306 = sbr.rel (%p304) target = $region24
        $region23: #{tpu_custom_call.1} parent=11 // pred_region
          _
        $region24: #{tpu_custom_call.1} parent=11 // pred_fallthru
          _
      $region12: #{tpu_custom_call.1} parent=5 // pred_fallthru
        _
      %p307 = scmp.lt.s32.totalorder %s23, 3
      // Predicated region
      $region25: #{tpu_custom_call.1} parent=5 // pred_check
        %p308 = pneg %p307
      $region26: #{tpu_custom_call.1} parent=5 // pred_check_branch
        %310 = sbr.rel (%p308) target = $region28
      $region27: #{tpu_custom_call.1} parent=5 // pred_region
        // Predicated region
        $region29: #{tpu_custom_call.1} parent=27 // pred_check
          %p311 = pneg %p81
        $region30: #{tpu_custom_call.1} parent=27 // pred_check_branch
          %313 = sbr.rel (%p311) target = $region32
        $region31: #{tpu_custom_call.1} parent=27 // pred_region
          %s314 = sand.u32 %s23, 1
          %s315 = scalar_lea.sflag [#allocation11], %s314
          %s316 = sand.u32 %s71, 1
          %s317 = smul.addr %s316, 128
          %s318 = scalar_lea.vmem [#allocation10], %s317
          %320 = vsyncadd %s315, 0
          %s321 = smul.addr %s31, 16
          %s322 = smul.addr %s321, 8
          %s323 = scalar_lea.hbm %s1, %s322
          %s324 = sshll.u32 %s323, 4
          %s325 = int_to_ptr.hbm [resolvable:$true] %s324
          %s326 = sshll.u32 %s318, 4
          %s327 = int_to_ptr.vmem [resolvable:$true] %s326
          %332 = dma.hbm_to_vmem [thread:$0]  %s325, 2048, %s327, %s315, 128, 128, 8
        $region32: #{tpu_custom_call.1} parent=27 // pred_fallthru
          _
        // Predicated region
        $region33: #{tpu_custom_call.1} parent=27 // pred_check
          %p333 = pneg %p107
        $region34: #{tpu_custom_call.1} parent=27 // pred_check_branch
          %335 = sbr.rel (%p333) target = $region36
        $region35: #{tpu_custom_call.1} parent=27 // pred_region
          %s336 = sand.u32 %s23, 1
          %s337 = scalar_lea.sflag [#allocation11], %s336
          %s338 = sand.u32 %s97, 1
          %s339 = smul.addr %s338, 128
          %s340 = scalar_lea.vmem [#allocation12], %s339
          %342 = vsyncadd %s337, 0
          %s343 = smul.addr %s31, 16
          %s344 = smul.addr %s343, 8
          %s345 = scalar_lea.hbm %s2, %s344
          %s346 = sshll.u32 %s345, 4
          %s347 = int_to_ptr.hbm [resolvable:$true] %s346
          %s348 = sshll.u32 %s340, 4
          %s349 = int_to_ptr.vmem [resolvable:$true] %s348
          %354 = dma.hbm_to_vmem [thread:$0]  %s347, 2048, %s349, %s337, 128, 128, 8
        $region36: #{tpu_custom_call.1} parent=27 // pred_fallthru
          _
        // Predicated region
        $region37: #{tpu_custom_call.1} parent=27 // pred_check
          %p355 = pneg %p133
        $region38: #{tpu_custom_call.1} parent=27 // pred_check_branch
          %357 = sbr.rel (%p355) target = $region40
        $region39: #{tpu_custom_call.1} parent=27 // pred_region
          %s358 = sand.u32 %s23, 1
          %s359 = scalar_lea.sflag [#allocation14], %s358
          %s360 = sand.u32 %s123, 1
          %s361 = smul.addr %s360, 128
          %s362 = scalar_lea.vmem [#allocation13], %s361
          %364 = vsyncadd %s359, 0
          %s365 = smul.addr %s31, 16
          %s366 = smul.addr %s365, 8
          %s367 = scalar_lea.hbm %s3, %s366
          %s368 = sshll.u32 %s367, 4
          %s369 = int_to_ptr.hbm [resolvable:$true] %s368
          %s370 = sshll.u32 %s362, 4
          %s371 = int_to_ptr.vmem [resolvable:$true] %s370
          %376 = dma.hbm_to_vmem [thread:$0]  %s369, 2048, %s371, %s359, 128, 128, 8
        $region40: #{tpu_custom_call.1} parent=27 // pred_fallthru
          _
        // Predicated region
        $region41: #{tpu_custom_call.1} parent=27 // pred_check
          %p377 = pneg %p159
        $region42: #{tpu_custom_call.1} parent=27 // pred_check_branch
          %379 = sbr.rel (%p377) target = $region44
        $region43: #{tpu_custom_call.1} parent=27 // pred_region
          %s380 = sand.u32 %s23, 1
          %s381 = scalar_lea.sflag [#allocation14], %s380
          %s382 = sand.u32 %s149, 1
          %s383 = smul.addr %s382, 128
          %s384 = scalar_lea.vmem [#allocation15], %s383
          %386 = vsyncadd %s381, 0
          %s387 = smul.addr %s31, 16
          %s388 = smul.addr %s387, 8
          %s389 = scalar_lea.hbm %s4, %s388
          %s390 = sshll.u32 %s389, 4
          %s391 = int_to_ptr.hbm [resolvable:$true] %s390
          %s392 = sshll.u32 %s384, 4
          %s393 = int_to_ptr.vmem [resolvable:$true] %s392
          %398 = dma.hbm_to_vmem [thread:$0]  %s391, 2048, %s393, %s381, 128, 128, 8
        $region44: #{tpu_custom_call.1} parent=27 // pred_fallthru
          _
        // Predicated region
        $region45: #{tpu_custom_call.1} parent=27 // pred_check
          %p399 = pneg %p185
        $region46: #{tpu_custom_call.1} parent=27 // pred_check_branch
          %401 = sbr.rel (%p399) target = $region48
        $region47: #{tpu_custom_call.1} parent=27 // pred_region
          %p402 = scmp.lt.s32.totalorder %s31, 2
          %s403 = scalar_select %p402, %s31, 2
          %s404 = scalar_lea.vmem %s5, %s403
        $region48: #{tpu_custom_call.1} parent=27 // pred_fallthru
          _
      $region28: #{tpu_custom_call.1} parent=5 // pred_fallthru
        _
      %p405 = scmp.le.s32.totalorder 1, %s23
      %p406 = scmp.lt.s32.totalorder %s23, 4
      %p407 = pnand %p405, %p406
      %p408 = pneg %p407
      // Predicated region
      $region49: #{tpu_custom_call.1} parent=5 // pred_check
        _
      $region50: #{tpu_custom_call.1} parent=5 // pred_check_branch
        %410 = sbr.rel (%p407) target = $region52
      $region51: #{tpu_custom_call.1} parent=5 // pred_region
        %s411 = ssub.s32 %s23, 1
        // Predicated region
        $region53: #{tpu_custom_call.1} parent=51 // pred_check
          %p412 = pneg %p61
        $region54: #{tpu_custom_call.1} parent=51 // pred_check_branch
          %414 = sbr.rel (%p412) target = $region56
        $region55: #{tpu_custom_call.1} parent=51 // pred_region
          %416 = dma.done [#allocation8], 1024
        $region56: #{tpu_custom_call.1} parent=51 // pred_fallthru
          _
        %s417 = sand.u32 %s28, 1
        %s418 = scalar_lea.sflag [#allocation11], %s417
        %s419 = sand.u32 %s74, 1
        %s420 = smul.addr %s419, 128
        %s421 = scalar_lea.vmem [#allocation10], %s420
        // Predicated region
        $region57: #{tpu_custom_call.1} parent=51 // pred_check
          %p422 = pneg %p87
        $region58: #{tpu_custom_call.1} parent=51 // pred_check_branch
          %424 = sbr.rel (%p422) target = $region60
        $region59: #{tpu_custom_call.1} parent=51 // pred_region
          %426 = dma.done %s418, 2048
        $region60: #{tpu_custom_call.1} parent=51 // pred_fallthru
          _
        %s427 = sand.u32 %s28, 1
        %s428 = scalar_lea.sflag [#allocation11], %s427
        %s429 = sand.u32 %s100, 1
        %s430 = smul.addr %s429, 128
        %s431 = scalar_lea.vmem [#allocation12], %s430
        // Predicated region
        $region61: #{tpu_custom_call.1} parent=51 // pred_check
          %p432 = pneg %p113
        $region62: #{tpu_custom_call.1} parent=51 // pred_check_branch
          %434 = sbr.rel (%p432) target = $region64
        $region63: #{tpu_custom_call.1} parent=51 // pred_region
          %436 = dma.done %s428, 2048
        $region64: #{tpu_custom_call.1} parent=51 // pred_fallthru
          _
        %s437 = sand.u32 %s28, 1
        %s438 = scalar_lea.sflag [#allocation14], %s437
        %s439 = sand.u32 %s126, 1
        %s440 = smul.addr %s439, 128
        %s441 = scalar_lea.vmem [#allocation13], %s440
        // Predicated region
        $region65: #{tpu_custom_call.1} parent=51 // pred_check
          %p442 = pneg %p139
        $region66: #{tpu_custom_call.1} parent=51 // pred_check_branch
          %444 = sbr.rel (%p442) target = $region68
        $region67: #{tpu_custom_call.1} parent=51 // pred_region
          %446 = dma.done %s438, 2048
        $region68: #{tpu_custom_call.1} parent=51 // pred_fallthru
          _
        %s447 = sand.u32 %s28, 1
        %s448 = scalar_lea.sflag [#allocation14], %s447
        %s449 = sand.u32 %s152, 1
        %s450 = smul.addr %s449, 128
        %s451 = scalar_lea.vmem [#allocation15], %s450
        // Predicated region
        $region69: #{tpu_custom_call.1} parent=51 // pred_check
          %p452 = pneg %p165
        $region70: #{tpu_custom_call.1} parent=51 // pred_check_branch
          %454 = sbr.rel (%p452) target = $region72
        $region71: #{tpu_custom_call.1} parent=51 // pred_region
          %456 = dma.done %s448, 2048
        $region72: #{tpu_custom_call.1} parent=51 // pred_fallthru
          _
        // Predicated region
        $region73: #{tpu_custom_call.1} parent=51 // pred_check
          %p457 = pneg %p212
        $region74: #{tpu_custom_call.1} parent=51 // pred_check_branch
          %459 = sbr.rel (%p457) target = $region76
        $region75: #{tpu_custom_call.1} parent=51 // pred_region
          %461 = dma.done [#allocation17], 2048
        $region76: #{tpu_custom_call.1} parent=51 // pred_fallthru
          _
        %p462 = pneg %p61
        %p463 = pneg %p58
        %s464 = sand.u32 %s28, 1
        %s465 = scalar_lea.sflag [#allocation11], %s464
        %s466 = sand.u32 %s74, 1
        %s467 = smul.addr %s466, 128
        %s468 = scalar_lea.vmem [#allocation10], %s467
        %p469 = pneg %p87
        %p470 = pneg %p84
        %s471 = sand.u32 %s28, 1
        %s472 = scalar_lea.sflag [#allocation11], %s471
        %s473 = sand.u32 %s100, 1
        %s474 = smul.addr %s473, 128
        %s475 = scalar_lea.vmem [#allocation12], %s474
        %p476 = pneg %p113
        %p477 = pneg %p110
        %s478 = sand.u32 %s28, 1
        %s479 = scalar_lea.sflag [#allocation14], %s478
        %s480 = sand.u32 %s126, 1
        %s481 = smul.addr %s480, 128
        %s482 = scalar_lea.vmem [#allocation13], %s481
        %p483 = pneg %p139
        %p484 = pneg %p136
        %s485 = sand.u32 %s28, 1
        %s486 = scalar_lea.sflag [#allocation14], %s485
        %s487 = sand.u32 %s152, 1
        %s488 = smul.addr %s487, 128
        %s489 = scalar_lea.vmem [#allocation15], %s488
        %p490 = pneg %p165
        %p491 = pneg %p162
        %p492 = scmp.lt.s32.totalorder %s33, 2
        %s493 = scalar_select %p492, %s33, 2
        %s494 = scalar_lea.vmem %s5, %s493
        %p495 = pneg %p191
        %p496 = pneg %p188
        %p497 = pneg %p212
        %p498 = pneg %p209
        %p499 = pneg %p233
        %p500 = pneg %p230
        %p501 = pneg %p259
        %p502 = pneg %p256
        %p503 = scmp.lt.s32.totalorder %s33, 2
        %s504 = scalar_select %p503, %s33, 2
        %s505 = scalar_lea.vmem %s5, %s504
        %p506 = scmp.eq.s32.totalorder %s33, 0
        // Predicated region
        $region77: #{tpu_custom_call.1} parent=51 // pred_check
          %p507 = pneg %p506
        $region78: #{tpu_custom_call.1} parent=51 // pred_check_branch
          %509 = sbr.rel (%p507) target = $region80
        $region79: #{tpu_custom_call.1} parent=51 // pred_region
          %v510 = vld [vmem:[#allocation7] sm:$0xff]
          %v511 = vld [vmem:[#allocation7 + $0x8] sm:$0xff]
          %v512 = vld [vmem:[#allocation7 + $0x10] sm:$0xff]
          %v513 = vld [vmem:[#allocation7 + $0x18] sm:$0xff]
          %v514 = vld [vmem:[#allocation7 + $0x20] sm:$0xff]
          %v515 = vld [vmem:[#allocation7 + $0x28] sm:$0xff]
          %v516 = vld [vmem:[#allocation7 + $0x30] sm:$0xff]
          %v517 = vld [vmem:[#allocation7 + $0x38] sm:$0xff]
          %518 = vst [vmem:[#allocation2] sm:$0xff] %v510
          %519 = vst [vmem:[#allocation2 + $0x8] sm:$0xff] %v511
          %520 = vst [vmem:[#allocation2 + $0x10] sm:$0xff] %v512
          %521 = vst [vmem:[#allocation2 + $0x18] sm:$0xff] %v513
          %522 = vst [vmem:[#allocation2 + $0x20] sm:$0xff] %v514
          %523 = vst [vmem:[#allocation2 + $0x28] sm:$0xff] %v515
          %524 = vst [vmem:[#allocation2 + $0x30] sm:$0xff] %v516
          %525 = vst [vmem:[#allocation2 + $0x38] sm:$0xff] %v517
          %526 = vst [vmem:[#allocation3] sm:$0xff] 0.0
        $region80: #{tpu_custom_call.1} parent=51 // pred_fallthru
          _
        %v527 = vld [vmem:[#allocation2] sm:$0xff]
        %v528 = vld [vmem:[#allocation2 + $0x8] sm:$0xff]
        %v529 = vld [vmem:[#allocation2 + $0x10] sm:$0xff]
        %v530 = vld [vmem:[#allocation2 + $0x18] sm:$0xff]
        %v531 = vld [vmem:[#allocation2 + $0x20] sm:$0xff]
        %v532 = vld [vmem:[#allocation2 + $0x28] sm:$0xff]
        %v533 = vld [vmem:[#allocation2 + $0x30] sm:$0xff]
        %v534 = vld [vmem:[#allocation2 + $0x38] sm:$0xff]
        %v535 = vld [vmem:[%s421] sm:$0xff]
        %v536 = vld [vmem:[%s421 + $0x8] sm:$0xff]
        %v537 = vld [vmem:[%s421 + $0x10] sm:$0xff]
        %v538 = vld [vmem:[%s421 + $0x18] sm:$0xff]
        %v539 = vld [vmem:[%s421 + $0x20] sm:$0xff]
        %v540 = vld [vmem:[%s421 + $0x28] sm:$0xff]
        %v541 = vld [vmem:[%s421 + $0x30] sm:$0xff]
        %v542 = vld [vmem:[%s421 + $0x38] sm:$0xff]
        %v543 = vld [vmem:[%s421 + $0x40] sm:$0xff]
        %v544 = vld [vmem:[%s421 + $0x48] sm:$0xff]
        %v545 = vld [vmem:[%s421 + $0x50] sm:$0xff]
        %v546 = vld [vmem:[%s421 + $0x58] sm:$0xff]
        %v547 = vld [vmem:[%s421 + $0x60] sm:$0xff]
        %v548 = vld [vmem:[%s421 + $0x68] sm:$0xff]
        %v549 = vld [vmem:[%s421 + $0x70] sm:$0xff]
        %v550 = vld [vmem:[%s421 + $0x78] sm:$0xff]
        %551 = vmatpush.msra.mxu0 %v550
        %552 = vmatpush.msra.mxu0 %v549
        %553 = vmatpush.msra.mxu0 %v548
        %554 = vmatpush.msra.mxu0 %v547
        %555 = vmatpush.msra.mxu0 %v546
        %556 = vmatpush.msra.mxu0 %v545
        %557 = vmatpush.msra.mxu0 %v544
        %558 = vmatpush.msra.mxu0 %v543
        %559 = vmatpush.msra.mxu0 %v542
        %560 = vmatpush.msra.mxu0 %v541
        %561 = vmatpush.msra.mxu0 %v540
        %562 = vmatpush.msra.mxu0 %v539
        %563 = vmatpush.msra.mxu0 %v538
        %564 = vmatpush.msra.mxu0 %v537
        %565 = vmatpush.msra.mxu0 %v536
        %566 = vmatpush.msra.mxu0 %v535
        %567 = vmatmul.f32.gmra.mxu0 %v527
        %v568 = vpop.f32.mrf.mxu0
        %v569 = vadd.f32 0.0, %v568
        %570 = vmatmul.f32.gmra.mxu0 %v528
        %v571 = vpop.f32.mrf.mxu0
        %v572 = vadd.f32 0.0, %v571
        %573 = vmatmul.f32.gmra.mxu0 %v529
        %v574 = vpop.f32.mrf.mxu0
        %v575 = vadd.f32 0.0, %v574
        %576 = vmatmul.f32.gmra.mxu0 %v530
        %v577 = vpop.f32.mrf.mxu0
        %v578 = vadd.f32 0.0, %v577
        %579 = vmatmul.f32.gmra.mxu0 %v531
        %v580 = vpop.f32.mrf.mxu0
        %v581 = vadd.f32 0.0, %v580
        %582 = vmatmul.f32.gmra.mxu0 %v532
        %v583 = vpop.f32.mrf.mxu0
        %v584 = vadd.f32 0.0, %v583
        %585 = vmatmul.f32.gmra.mxu0 %v533
        %v586 = vpop.f32.mrf.mxu0
        %v587 = vadd.f32 0.0, %v586
        %588 = vmatmul.f32.gmra.mxu0 %v534
        %v589 = vpop.f32.mrf.mxu0
        %v590 = vadd.f32 0.0, %v589
        %591 = vdwg.mxu0
        %v592 = vld [vmem:[%s431] sm:$0xff]
        %v593 = vld [vmem:[%s431 + $0x8] sm:$0xff]
        %v594 = vld [vmem:[%s431 + $0x10] sm:$0xff]
        %v595 = vld [vmem:[%s431 + $0x18] sm:$0xff]
        %v596 = vld [vmem:[%s431 + $0x20] sm:$0xff]
        %v597 = vld [vmem:[%s431 + $0x28] sm:$0xff]
        %v598 = vld [vmem:[%s431 + $0x30] sm:$0xff]
        %v599 = vld [vmem:[%s431 + $0x38] sm:$0xff]
        %v600 = vld [vmem:[%s431 + $0x40] sm:$0xff]
        %v601 = vld [vmem:[%s431 + $0x48] sm:$0xff]
        %v602 = vld [vmem:[%s431 + $0x50] sm:$0xff]
        %v603 = vld [vmem:[%s431 + $0x58] sm:$0xff]
        %v604 = vld [vmem:[%s431 + $0x60] sm:$0xff]
        %v605 = vld [vmem:[%s431 + $0x68] sm:$0xff]
        %v606 = vld [vmem:[%s431 + $0x70] sm:$0xff]
        %v607 = vld [vmem:[%s431 + $0x78] sm:$0xff]
        %608 = vmatpush.msra.mxu0 %v607
        %609 = vmatpush.msra.mxu0 %v606
        %610 = vmatpush.msra.mxu0 %v605
        %611 = vmatpush.msra.mxu0 %v604
        %612 = vmatpush.msra.mxu0 %v603
        %613 = vmatpush.msra.mxu0 %v602
        %614 = vmatpush.msra.mxu0 %v601
        %615 = vmatpush.msra.mxu0 %v600
        %616 = vmatpush.msra.mxu0 %v599
        %617 = vmatpush.msra.mxu0 %v598
        %618 = vmatpush.msra.mxu0 %v597
        %619 = vmatpush.msra.mxu0 %v596
        %620 = vmatpush.msra.mxu0 %v595
        %621 = vmatpush.msra.mxu0 %v594
        %622 = vmatpush.msra.mxu0 %v593
        %623 = vmatpush.msra.mxu0 %v592
        %624 = vmatmul.f32.gmra.mxu0 %v527
        %v625 = vpop.f32.mrf.mxu0
        %v626 = vadd.f32 0.0, %v625
        %627 = vmatmul.f32.gmra.mxu0 %v528
        %v628 = vpop.f32.mrf.mxu0
        %v629 = vadd.f32 0.0, %v628
        %630 = vmatmul.f32.gmra.mxu0 %v529
        %v631 = vpop.f32.mrf.mxu0
        %v632 = vadd.f32 0.0, %v631
        %633 = vmatmul.f32.gmra.mxu0 %v530
        %v634 = vpop.f32.mrf.mxu0
        %v635 = vadd.f32 0.0, %v634
        %636 = vmatmul.f32.gmra.mxu0 %v531
        %v637 = vpop.f32.mrf.mxu0
        %v638 = vadd.f32 0.0, %v637
        %639 = vmatmul.f32.gmra.mxu0 %v532
        %v640 = vpop.f32.mrf.mxu0
        %v641 = vadd.f32 0.0, %v640
        %642 = vmatmul.f32.gmra.mxu0 %v533
        %v643 = vpop.f32.mrf.mxu0
        %v644 = vadd.f32 0.0, %v643
        %645 = vmatmul.f32.gmra.mxu0 %v534
        %v646 = vpop.f32.mrf.mxu0
        %v647 = vadd.f32 0.0, %v646
        %648 = vdwg.mxu0
        %v649 = vxor.u32 %v626, 2147483648
        %v650 = vxor.u32 %v629, 2147483648
        %v651 = vxor.u32 %v632, 2147483648
        %v652 = vxor.u32 %v635, 2147483648
        %v653 = vxor.u32 %v638, 2147483648
        %v654 = vxor.u32 %v641, 2147483648
        %v655 = vxor.u32 %v644, 2147483648
        %v656 = vxor.u32 %v647, 2147483648
        %v657 = vmul.f32 %v649, 1.442695
        %v658 = vpow.pop %v657
        %v659 = vmul.f32 %v650, 1.442695
        %v660 = vpow.pop %v659
        %v661 = vmul.f32 %v651, 1.442695
        %v662 = vpow.pop %v661
        %v663 = vmul.f32 %v652, 1.442695
        %v664 = vpow.pop %v663
        %v665 = vmul.f32 %v653, 1.442695
        %v666 = vpow.pop %v665
        %v667 = vmul.f32 %v654, 1.442695
        %v668 = vpow.pop %v667
        %v669 = vmul.f32 %v655, 1.442695
        %v670 = vpow.pop %v669
        %v671 = vmul.f32 %v656, 1.442695
        %v672 = vpow.pop %v671
        %v673 = vadd.f32 %v658, 1.0
        %v674 = vadd.f32 %v660, 1.0
        %v675 = vadd.f32 %v662, 1.0
        %v676 = vadd.f32 %v664, 1.0
        %v677 = vadd.f32 %v666, 1.0
        %v678 = vadd.f32 %v668, 1.0
        %v679 = vadd.f32 %v670, 1.0
        %v680 = vadd.f32 %v672, 1.0
        %v681 = vrcp.pop %v673
        %v682 = vmul.f32 %v673, %v681
        %v683 = vsub.f32 1.0, %v682
        %v684 = vmul.f32 %v681, %v683
        %v685 = vadd.f32 %v681, %v684
        %vm686 = vweird.f32 %v673
        %vm687 = vweird.f32 %v681
        %vm688 = vmor %vm686, %vm687
        %v689 = vsel %vm688, %v681, %v685
        %v690 = vand.u32 2147483647, %v673
        %vm691 = vcmp.eq.f32.partialorder %v690, 8.507059e+37
        %v692 = vand.u32 %v673, 2147483648
        %v693 = vor.u32 1.1754944e-38, %v692
        %v694 = vsel %vm691, %v693, %v689
        %v695 = vmul.f32 1.0, %v694
        %v696 = vrcp.pop %v674
        %v697 = vmul.f32 %v674, %v696
        %v698 = vsub.f32 1.0, %v697
        %v699 = vmul.f32 %v696, %v698
        %v700 = vadd.f32 %v696, %v699
        %vm701 = vweird.f32 %v674
        %vm702 = vweird.f32 %v696
        %vm703 = vmor %vm701, %vm702
        %v704 = vsel %vm703, %v696, %v700
        %v705 = vand.u32 2147483647, %v674
        %vm706 = vcmp.eq.f32.partialorder %v705, 8.507059e+37
        %v707 = vand.u32 %v674, 2147483648
        %v708 = vor.u32 1.1754944e-38, %v707
        %v709 = vsel %vm706, %v708, %v704
        %v710 = vmul.f32 1.0, %v709
        %v711 = vrcp.pop %v675
        %v712 = vmul.f32 %v675, %v711
        %v713 = vsub.f32 1.0, %v712
        %v714 = vmul.f32 %v711, %v713
        %v715 = vadd.f32 %v711, %v714
        %vm716 = vweird.f32 %v675
        %vm717 = vweird.f32 %v711
        %vm718 = vmor %vm716, %vm717
        %v719 = vsel %vm718, %v711, %v715
        %v720 = vand.u32 2147483647, %v675
        %vm721 = vcmp.eq.f32.partialorder %v720, 8.507059e+37
        %v722 = vand.u32 %v675, 2147483648
        %v723 = vor.u32 1.1754944e-38, %v722
        %v724 = vsel %vm721, %v723, %v719
        %v725 = vmul.f32 1.0, %v724
        %v726 = vrcp.pop %v676
        %v727 = vmul.f32 %v676, %v726
        %v728 = vsub.f32 1.0, %v727
        %v729 = vmul.f32 %v726, %v728
        %v730 = vadd.f32 %v726, %v729
        %vm731 = vweird.f32 %v676
        %vm732 = vweird.f32 %v726
        %vm733 = vmor %vm731, %vm732
        %v734 = vsel %vm733, %v726, %v730
        %v735 = vand.u32 2147483647, %v676
        %vm736 = vcmp.eq.f32.partialorder %v735, 8.507059e+37
        %v737 = vand.u32 %v676, 2147483648
        %v738 = vor.u32 1.1754944e-38, %v737
        %v739 = vsel %vm736, %v738, %v734
        %v740 = vmul.f32 1.0, %v739
        %v741 = vrcp.pop %v677
        %v742 = vmul.f32 %v677, %v741
        %v743 = vsub.f32 1.0, %v742
        %v744 = vmul.f32 %v741, %v743
        %v745 = vadd.f32 %v741, %v744
        %vm746 = vweird.f32 %v677
        %vm747 = vweird.f32 %v741
        %vm748 = vmor %vm746, %vm747
        %v749 = vsel %vm748, %v741, %v745
        %v750 = vand.u32 2147483647, %v677
        %vm751 = vcmp.eq.f32.partialorder %v750, 8.507059e+37
        %v752 = vand.u32 %v677, 2147483648
        %v753 = vor.u32 1.1754944e-38, %v752
        %v754 = vsel %vm751, %v753, %v749
        %v755 = vmul.f32 1.0, %v754
        %v756 = vrcp.pop %v678
        %v757 = vmul.f32 %v678, %v756
        %v758 = vsub.f32 1.0, %v757
        %v759 = vmul.f32 %v756, %v758
        %v760 = vadd.f32 %v756, %v759
        %vm761 = vweird.f32 %v678
        %vm762 = vweird.f32 %v756
        %vm763 = vmor %vm761, %vm762
        %v764 = vsel %vm763, %v756, %v760
        %v765 = vand.u32 2147483647, %v678
        %vm766 = vcmp.eq.f32.partialorder %v765, 8.507059e+37
        %v767 = vand.u32 %v678, 2147483648
        %v768 = vor.u32 1.1754944e-38, %v767
        %v769 = vsel %vm766, %v768, %v764
        %v770 = vmul.f32 1.0, %v769
        %v771 = vrcp.pop %v679
        %v772 = vmul.f32 %v679, %v771
        %v773 = vsub.f32 1.0, %v772
        %v774 = vmul.f32 %v771, %v773
        %v775 = vadd.f32 %v771, %v774
        %vm776 = vweird.f32 %v679
        %vm777 = vweird.f32 %v771
        %vm778 = vmor %vm776, %vm777
        %v779 = vsel %vm778, %v771, %v775
        %v780 = vand.u32 2147483647, %v679
        %vm781 = vcmp.eq.f32.partialorder %v780, 8.507059e+37
        %v782 = vand.u32 %v679, 2147483648
        %v783 = vor.u32 1.1754944e-38, %v782
        %v784 = vsel %vm781, %v783, %v779
        %v785 = vmul.f32 1.0, %v784
        %v786 = vrcp.pop %v680
        %v787 = vmul.f32 %v680, %v786
        %v788 = vsub.f32 1.0, %v787
        %v789 = vmul.f32 %v786, %v788
        %v790 = vadd.f32 %v786, %v789
        %vm791 = vweird.f32 %v680
        %vm792 = vweird.f32 %v786
        %vm793 = vmor %vm791, %vm792
        %v794 = vsel %vm793, %v786, %v790
        %v795 = vand.u32 2147483647, %v680
        %vm796 = vcmp.eq.f32.partialorder %v795, 8.507059e+37
        %v797 = vand.u32 %v680, 2147483648
        %v798 = vor.u32 1.1754944e-38, %v797
        %v799 = vsel %vm796, %v798, %v794
        %v800 = vmul.f32 1.0, %v799
        %v801 = vsub.f32 1.0, %v695
        %v802 = vsub.f32 1.0, %v710
        %v803 = vsub.f32 1.0, %v725
        %v804 = vsub.f32 1.0, %v740
        %v805 = vsub.f32 1.0, %v755
        %v806 = vsub.f32 1.0, %v770
        %v807 = vsub.f32 1.0, %v785
        %v808 = vsub.f32 1.0, %v800
        %809 = vst [vmem:[#allocation4] sm:$0xff] %v801
        %810 = vst [vmem:[#allocation4 + $0x8] sm:$0xff] %v802
        %811 = vst [vmem:[#allocation4 + $0x10] sm:$0xff] %v803
        %812 = vst [vmem:[#allocation4 + $0x18] sm:$0xff] %v804
        %813 = vst [vmem:[#allocation4 + $0x20] sm:$0xff] %v805
        %814 = vst [vmem:[#allocation4 + $0x28] sm:$0xff] %v806
        %815 = vst [vmem:[#allocation4 + $0x30] sm:$0xff] %v807
        %816 = vst [vmem:[#allocation4 + $0x38] sm:$0xff] %v808
        %vm817 = vcmp.ge.f32.partialorder %v569, 0.0
        %vm818 = vcmp.ge.f32.partialorder %v572, 0.0
        %vm819 = vcmp.ge.f32.partialorder %v575, 0.0
        %vm820 = vcmp.ge.f32.partialorder %v578, 0.0
        %vm821 = vcmp.ge.f32.partialorder %v581, 0.0
        %vm822 = vcmp.ge.f32.partialorder %v584, 0.0
        %vm823 = vcmp.ge.f32.partialorder %v587, 0.0
        %vm824 = vcmp.ge.f32.partialorder %v590, 0.0
        %v825 = vadd.f32 %v569, 0.5
        %v826 = vadd.f32 %v572, 0.5
        %v827 = vadd.f32 %v575, 0.5
        %v828 = vadd.f32 %v578, 0.5
        %v829 = vadd.f32 %v581, 0.5
        %v830 = vadd.f32 %v584, 0.5
        %v831 = vadd.f32 %v587, 0.5
        %v832 = vadd.f32 %v590, 0.5
        %v833 = vxor.u32 %v569, 2147483648
        %v834 = vxor.u32 %v572, 2147483648
        %v835 = vxor.u32 %v575, 2147483648
        %v836 = vxor.u32 %v578, 2147483648
        %v837 = vxor.u32 %v581, 2147483648
        %v838 = vxor.u32 %v584, 2147483648
        %v839 = vxor.u32 %v587, 2147483648
        %v840 = vxor.u32 %v590, 2147483648
        %v841 = vmul.f32 %v833, 1.442695
        %v842 = vpow.pop %v841
        %v843 = vmul.f32 %v834, 1.442695
        %v844 = vpow.pop %v843
        %v845 = vmul.f32 %v835, 1.442695
        %v846 = vpow.pop %v845
        %v847 = vmul.f32 %v836, 1.442695
        %v848 = vpow.pop %v847
        %v849 = vmul.f32 %v837, 1.442695
        %v850 = vpow.pop %v849
        %v851 = vmul.f32 %v838, 1.442695
        %v852 = vpow.pop %v851
        %v853 = vmul.f32 %v839, 1.442695
        %v854 = vpow.pop %v853
        %v855 = vmul.f32 %v840, 1.442695
        %v856 = vpow.pop %v855
        %v857 = vadd.f32 %v842, 1.0
        %v858 = vadd.f32 %v844, 1.0
        %v859 = vadd.f32 %v846, 1.0
        %v860 = vadd.f32 %v848, 1.0
        %v861 = vadd.f32 %v850, 1.0
        %v862 = vadd.f32 %v852, 1.0
        %v863 = vadd.f32 %v854, 1.0
        %v864 = vadd.f32 %v856, 1.0
        %v865 = vrcp.pop %v857
        %v866 = vmul.f32 %v857, %v865
        %v867 = vsub.f32 1.0, %v866
        %v868 = vmul.f32 %v865, %v867
        %v869 = vadd.f32 %v865, %v868
        %vm870 = vweird.f32 %v857
        %vm871 = vweird.f32 %v865
        %vm872 = vmor %vm870, %vm871
        %v873 = vsel %vm872, %v865, %v869
        %v874 = vand.u32 2147483647, %v857
        %vm875 = vcmp.eq.f32.partialorder %v874, 8.507059e+37
        %v876 = vand.u32 %v857, 2147483648
        %v877 = vor.u32 1.1754944e-38, %v876
        %v878 = vsel %vm875, %v877, %v873
        %v879 = vmul.f32 1.0, %v878
        %v880 = vrcp.pop %v858
        %v881 = vmul.f32 %v858, %v880
        %v882 = vsub.f32 1.0, %v881
        %v883 = vmul.f32 %v880, %v882
        %v884 = vadd.f32 %v880, %v883
        %vm885 = vweird.f32 %v858
        %vm886 = vweird.f32 %v880
        %vm887 = vmor %vm885, %vm886
        %v888 = vsel %vm887, %v880, %v884
        %v889 = vand.u32 2147483647, %v858
        %vm890 = vcmp.eq.f32.partialorder %v889, 8.507059e+37
        %v891 = vand.u32 %v858, 2147483648
        %v892 = vor.u32 1.1754944e-38, %v891
        %v893 = vsel %vm890, %v892, %v888
        %v894 = vmul.f32 1.0, %v893
        %v895 = vrcp.pop %v859
        %v896 = vmul.f32 %v859, %v895
        %v897 = vsub.f32 1.0, %v896
        %v898 = vmul.f32 %v895, %v897
        %v899 = vadd.f32 %v895, %v898
        %vm900 = vweird.f32 %v859
        %vm901 = vweird.f32 %v895
        %vm902 = vmor %vm900, %vm901
        %v903 = vsel %vm902, %v895, %v899
        %v904 = vand.u32 2147483647, %v859
        %vm905 = vcmp.eq.f32.partialorder %v904, 8.507059e+37
        %v906 = vand.u32 %v859, 2147483648
        %v907 = vor.u32 1.1754944e-38, %v906
        %v908 = vsel %vm905, %v907, %v903
        %v909 = vmul.f32 1.0, %v908
        %v910 = vrcp.pop %v860
        %v911 = vmul.f32 %v860, %v910
        %v912 = vsub.f32 1.0, %v911
        %v913 = vmul.f32 %v910, %v912
        %v914 = vadd.f32 %v910, %v913
        %vm915 = vweird.f32 %v860
        %vm916 = vweird.f32 %v910
        %vm917 = vmor %vm915, %vm916
        %v918 = vsel %vm917, %v910, %v914
        %v919 = vand.u32 2147483647, %v860
        %vm920 = vcmp.eq.f32.partialorder %v919, 8.507059e+37
        %v921 = vand.u32 %v860, 2147483648
        %v922 = vor.u32 1.1754944e-38, %v921
        %v923 = vsel %vm920, %v922, %v918
        %v924 = vmul.f32 1.0, %v923
        %v925 = vrcp.pop %v861
        %v926 = vmul.f32 %v861, %v925
        %v927 = vsub.f32 1.0, %v926
        %v928 = vmul.f32 %v925, %v927
        %v929 = vadd.f32 %v925, %v928
        %vm930 = vweird.f32 %v861
        %vm931 = vweird.f32 %v925
        %vm932 = vmor %vm930, %vm931
        %v933 = vsel %vm932, %v925, %v929
        %v934 = vand.u32 2147483647, %v861
        %vm935 = vcmp.eq.f32.partialorder %v934, 8.507059e+37
        %v936 = vand.u32 %v861, 2147483648
        %v937 = vor.u32 1.1754944e-38, %v936
        %v938 = vsel %vm935, %v937, %v933
        %v939 = vmul.f32 1.0, %v938
        %v940 = vrcp.pop %v862
        %v941 = vmul.f32 %v862, %v940
        %v942 = vsub.f32 1.0, %v941
        %v943 = vmul.f32 %v940, %v942
        %v944 = vadd.f32 %v940, %v943
        %vm945 = vweird.f32 %v862
        %vm946 = vweird.f32 %v940
        %vm947 = vmor %vm945, %vm946
        %v948 = vsel %vm947, %v940, %v944
        %v949 = vand.u32 2147483647, %v862
        %vm950 = vcmp.eq.f32.partialorder %v949, 8.507059e+37
        %v951 = vand.u32 %v862, 2147483648
        %v952 = vor.u32 1.1754944e-38, %v951
        %v953 = vsel %vm950, %v952, %v948
        %v954 = vmul.f32 1.0, %v953
        %v955 = vrcp.pop %v863
        %v956 = vmul.f32 %v863, %v955
        %v957 = vsub.f32 1.0, %v956
        %v958 = vmul.f32 %v955, %v957
        %v959 = vadd.f32 %v955, %v958
        %vm960 = vweird.f32 %v863
        %vm961 = vweird.f32 %v955
        %vm962 = vmor %vm960, %vm961
        %v963 = vsel %vm962, %v955, %v959
        %v964 = vand.u32 2147483647, %v863
        %vm965 = vcmp.eq.f32.partialorder %v964, 8.507059e+37
        %v966 = vand.u32 %v863, 2147483648
        %v967 = vor.u32 1.1754944e-38, %v966
        %v968 = vsel %vm965, %v967, %v963
        %v969 = vmul.f32 1.0, %v968
        %v970 = vrcp.pop %v864
        %v971 = vmul.f32 %v864, %v970
        %v972 = vsub.f32 1.0, %v971
        %v973 = vmul.f32 %v970, %v972
        %v974 = vadd.f32 %v970, %v973
        %vm975 = vweird.f32 %v864
        %vm976 = vweird.f32 %v970
        %vm977 = vmor %vm975, %vm976
        %v978 = vsel %vm977, %v970, %v974
        %v979 = vand.u32 2147483647, %v864
        %vm980 = vcmp.eq.f32.partialorder %v979, 8.507059e+37
        %v981 = vand.u32 %v864, 2147483648
        %v982 = vor.u32 1.1754944e-38, %v981
        %v983 = vsel %vm980, %v982, %v978
        %v984 = vmul.f32 1.0, %v983
        %v985 = vsel %vm817, %v825, %v879
        %v986 = vsel %vm818, %v826, %v894
        %v987 = vsel %vm819, %v827, %v909
        %v988 = vsel %vm820, %v828, %v924
        %v989 = vsel %vm821, %v829, %v939
        %v990 = vsel %vm822, %v830, %v954
        %v991 = vsel %vm823, %v831, %v969
        %v992 = vsel %vm824, %v832, %v984
        %v993 = vmul.f32 %v695, %v985
        %v994 = vmul.f32 %v710, %v986
        %v995 = vmul.f32 %v725, %v987
        %v996 = vmul.f32 %v740, %v988
        %v997 = vmul.f32 %v755, %v989
        %v998 = vmul.f32 %v770, %v990
        %v999 = vmul.f32 %v785, %v991
        %v1000 = vmul.f32 %v800, %v992
        %1001 = vst [vmem:[#allocation5] sm:$0xff] %v993
        %1002 = vst [vmem:[#allocation5 + $0x8] sm:$0xff] %v994
        %1003 = vst [vmem:[#allocation5 + $0x10] sm:$0xff] %v995
        %1004 = vst [vmem:[#allocation5 + $0x18] sm:$0xff] %v996
        %1005 = vst [vmem:[#allocation5 + $0x20] sm:$0xff] %v997
        %1006 = vst [vmem:[#allocation5 + $0x28] sm:$0xff] %v998
        %1007 = vst [vmem:[#allocation5 + $0x30] sm:$0xff] %v999
        %1008 = vst [vmem:[#allocation5 + $0x38] sm:$0xff] %v1000
        %v1009 = vld [vmem:[#allocation3] sm:$0xff]
        %v1010 = vld [vmem:[#allocation4] sm:$0xff]
        %v1011 = vmul.f32 %v1010, %v1009
        %v1012 = vld [vmem:[#allocation5] sm:$0xff]
        %v1013 = vadd.f32 %v1011, %v1012
        %1014 = vst [vmem:[#allocation6] sm:$0xff] %v1013
        %s1015 = scalar_lea.vmem [#allocation4], 8
        %v1016 = vld [vmem:[%s1015] sm:$0xff]
        %v1017 = vmul.f32 %v1016, %v1013
        %s1018 = scalar_lea.vmem [#allocation5], 8
        %v1019 = vld [vmem:[%s1018] sm:$0xff]
        %v1020 = vadd.f32 %v1017, %v1019
        %s1021 = scalar_lea.vmem [#allocation6], 8
        %1022 = vst [vmem:[%s1021] sm:$0xff] %v1020
        %s1023 = scalar_lea.vmem [#allocation4], 16
        %v1024 = vld [vmem:[%s1023] sm:$0xff]
        %v1025 = vmul.f32 %v1024, %v1020
        %s1026 = scalar_lea.vmem [#allocation5], 16
        %v1027 = vld [vmem:[%s1026] sm:$0xff]
        %v1028 = vadd.f32 %v1025, %v1027
        %s1029 = scalar_lea.vmem [#allocation6], 16
        %1030 = vst [vmem:[%s1029] sm:$0xff] %v1028
        %s1031 = scalar_lea.vmem [#allocation4], 24
        %v1032 = vld [vmem:[%s1031] sm:$0xff]
        %v1033 = vmul.f32 %v1032, %v1028
        %s1034 = scalar_lea.vmem [#allocation5], 24
        %v1035 = vld [vmem:[%s1034] sm:$0xff]
        %v1036 = vadd.f32 %v1033, %v1035
        %s1037 = scalar_lea.vmem [#allocation6], 24
        %1038 = vst [vmem:[%s1037] sm:$0xff] %v1036
        %s1039 = scalar_lea.vmem [#allocation4], 32
        %v1040 = vld [vmem:[%s1039] sm:$0xff]
        %v1041 = vmul.f32 %v1040, %v1036
        %s1042 = scalar_lea.vmem [#allocation5], 32
        %v1043 = vld [vmem:[%s1042] sm:$0xff]
        %v1044 = vadd.f32 %v1041, %v1043
        %s1045 = scalar_lea.vmem [#allocation6], 32
        %1046 = vst [vmem:[%s1045] sm:$0xff] %v1044
        %s1047 = scalar_lea.vmem [#allocation4], 40
        %v1048 = vld [vmem:[%s1047] sm:$0xff]
        %v1049 = vmul.f32 %v1048, %v1044
        %s1050 = scalar_lea.vmem [#allocation5], 40
        %v1051 = vld [vmem:[%s1050] sm:$0xff]
        %v1052 = vadd.f32 %v1049, %v1051
        %s1053 = scalar_lea.vmem [#allocation6], 40
        %1054 = vst [vmem:[%s1053] sm:$0xff] %v1052
        %s1055 = scalar_lea.vmem [#allocation4], 48
        %v1056 = vld [vmem:[%s1055] sm:$0xff]
        %v1057 = vmul.f32 %v1056, %v1052
        %s1058 = scalar_lea.vmem [#allocation5], 48
        %v1059 = vld [vmem:[%s1058] sm:$0xff]
        %v1060 = vadd.f32 %v1057, %v1059
        %s1061 = scalar_lea.vmem [#allocation6], 48
        %1062 = vst [vmem:[%s1061] sm:$0xff] %v1060
        %s1063 = scalar_lea.vmem [#allocation4], 56
        %v1064 = vld [vmem:[%s1063] sm:$0xff]
        %v1065 = vmul.f32 %v1064, %v1060
        %s1066 = scalar_lea.vmem [#allocation5], 56
        %v1067 = vld [vmem:[%s1066] sm:$0xff]
        %v1068 = vadd.f32 %v1065, %v1067
        %s1069 = scalar_lea.vmem [#allocation6], 56
        %1070 = vst [vmem:[%s1069] sm:$0xff] %v1068
        %1071 = vst [vmem:[#allocation3] sm:$0xff] %v1068
        %v1072 = vld [vmem:[#allocation6] sm:$0xff]
        %v1073 = vld [vmem:[#allocation6 + $0x8] sm:$0xff]
        %v1074 = vld [vmem:[#allocation6 + $0x10] sm:$0xff]
        %v1075 = vld [vmem:[#allocation6 + $0x18] sm:$0xff]
        %v1076 = vld [vmem:[#allocation6 + $0x20] sm:$0xff]
        %v1077 = vld [vmem:[#allocation6 + $0x28] sm:$0xff]
        %v1078 = vld [vmem:[#allocation6 + $0x30] sm:$0xff]
        %v1079 = vld [vmem:[#allocation6 + $0x38] sm:$0xff]
        %v1080 = vld [vmem:[%s441] sm:$0xff]
        %v1081 = vld [vmem:[%s441 + $0x8] sm:$0xff]
        %v1082 = vld [vmem:[%s441 + $0x10] sm:$0xff]
        %v1083 = vld [vmem:[%s441 + $0x18] sm:$0xff]
        %v1084 = vld [vmem:[%s441 + $0x20] sm:$0xff]
        %v1085 = vld [vmem:[%s441 + $0x28] sm:$0xff]
        %v1086 = vld [vmem:[%s441 + $0x30] sm:$0xff]
        %v1087 = vld [vmem:[%s441 + $0x38] sm:$0xff]
        %v1088 = vld [vmem:[%s441 + $0x40] sm:$0xff]
        %v1089 = vld [vmem:[%s441 + $0x48] sm:$0xff]
        %v1090 = vld [vmem:[%s441 + $0x50] sm:$0xff]
        %v1091 = vld [vmem:[%s441 + $0x58] sm:$0xff]
        %v1092 = vld [vmem:[%s441 + $0x60] sm:$0xff]
        %v1093 = vld [vmem:[%s441 + $0x68] sm:$0xff]
        %v1094 = vld [vmem:[%s441 + $0x70] sm:$0xff]
        %v1095 = vld [vmem:[%s441 + $0x78] sm:$0xff]
        %1096 = vmatpush.msra.mxu0 %v1095
        %1097 = vmatpush.msra.mxu0 %v1094
        %1098 = vmatpush.msra.mxu0 %v1093
        %1099 = vmatpush.msra.mxu0 %v1092
        %1100 = vmatpush.msra.mxu0 %v1091
        %1101 = vmatpush.msra.mxu0 %v1090
        %1102 = vmatpush.msra.mxu0 %v1089
        %1103 = vmatpush.msra.mxu0 %v1088
        %1104 = vmatpush.msra.mxu0 %v1087
        %1105 = vmatpush.msra.mxu0 %v1086
        %1106 = vmatpush.msra.mxu0 %v1085
        %1107 = vmatpush.msra.mxu0 %v1084
        %1108 = vmatpush.msra.mxu0 %v1083
        %1109 = vmatpush.msra.mxu0 %v1082
        %1110 = vmatpush.msra.mxu0 %v1081
        %1111 = vmatpush.msra.mxu0 %v1080
        %1112 = vmatmul.f32.gmra.mxu0 %v1072
        %v1113 = vpop.f32.mrf.mxu0
        %v1114 = vadd.f32 0.0, %v1113
        %1115 = vmatmul.f32.gmra.mxu0 %v1073
        %v1116 = vpop.f32.mrf.mxu0
        %v1117 = vadd.f32 0.0, %v1116
        %1118 = vmatmul.f32.gmra.mxu0 %v1074
        %v1119 = vpop.f32.mrf.mxu0
        %v1120 = vadd.f32 0.0, %v1119
        %1121 = vmatmul.f32.gmra.mxu0 %v1075
        %v1122 = vpop.f32.mrf.mxu0
        %v1123 = vadd.f32 0.0, %v1122
        %1124 = vmatmul.f32.gmra.mxu0 %v1076
        %v1125 = vpop.f32.mrf.mxu0
        %v1126 = vadd.f32 0.0, %v1125
        %1127 = vmatmul.f32.gmra.mxu0 %v1077
        %v1128 = vpop.f32.mrf.mxu0
        %v1129 = vadd.f32 0.0, %v1128
        %1130 = vmatmul.f32.gmra.mxu0 %v1078
        %v1131 = vpop.f32.mrf.mxu0
        %v1132 = vadd.f32 0.0, %v1131
        %1133 = vmatmul.f32.gmra.mxu0 %v1079
        %v1134 = vpop.f32.mrf.mxu0
        %v1135 = vadd.f32 0.0, %v1134
        %1136 = vdwg.mxu0
        %v1137 = vld [vmem:[%s451] sm:$0xff]
        %v1138 = vld [vmem:[%s451 + $0x8] sm:$0xff]
        %v1139 = vld [vmem:[%s451 + $0x10] sm:$0xff]
        %v1140 = vld [vmem:[%s451 + $0x18] sm:$0xff]
        %v1141 = vld [vmem:[%s451 + $0x20] sm:$0xff]
        %v1142 = vld [vmem:[%s451 + $0x28] sm:$0xff]
        %v1143 = vld [vmem:[%s451 + $0x30] sm:$0xff]
        %v1144 = vld [vmem:[%s451 + $0x38] sm:$0xff]
        %v1145 = vld [vmem:[%s451 + $0x40] sm:$0xff]
        %v1146 = vld [vmem:[%s451 + $0x48] sm:$0xff]
        %v1147 = vld [vmem:[%s451 + $0x50] sm:$0xff]
        %v1148 = vld [vmem:[%s451 + $0x58] sm:$0xff]
        %v1149 = vld [vmem:[%s451 + $0x60] sm:$0xff]
        %v1150 = vld [vmem:[%s451 + $0x68] sm:$0xff]
        %v1151 = vld [vmem:[%s451 + $0x70] sm:$0xff]
        %v1152 = vld [vmem:[%s451 + $0x78] sm:$0xff]
        %v1153 = vld [vmem:[%s505] sm:$0x1]
        %v1155 = vperm.slane %v1153, 0
        %1157 = vmatpush.msra.mxu0 %v1152
        %1158 = vmatpush.msra.mxu0 %v1151
        %1159 = vmatpush.msra.mxu0 %v1150
        %1160 = vmatpush.msra.mxu0 %v1149
        %1161 = vmatpush.msra.mxu0 %v1148
        %1162 = vmatpush.msra.mxu0 %v1147
        %1163 = vmatpush.msra.mxu0 %v1146
        %1164 = vmatpush.msra.mxu0 %v1145
        %1165 = vmatpush.msra.mxu0 %v1144
        %1166 = vmatpush.msra.mxu0 %v1143
        %1167 = vmatpush.msra.mxu0 %v1142
        %1168 = vmatpush.msra.mxu0 %v1141
        %1169 = vmatpush.msra.mxu0 %v1140
        %1170 = vmatpush.msra.mxu0 %v1139
        %1171 = vmatpush.msra.mxu0 %v1138
        %1172 = vmatpush.msra.mxu0 %v1137
        %1173 = vmatmul.f32.gmra.mxu0 %v1114
        %v1174 = vpop.f32.mrf.mxu0
        %v1175 = vadd.f32 %v1155, %v1174
        %1176 = vmatmul.f32.gmra.mxu0 %v1117
        %v1177 = vpop.f32.mrf.mxu0
        %v1178 = vadd.f32 %v1155, %v1177
        %1179 = vmatmul.f32.gmra.mxu0 %v1120
        %v1180 = vpop.f32.mrf.mxu0
        %v1181 = vadd.f32 %v1155, %v1180
        %1182 = vmatmul.f32.gmra.mxu0 %v1123
        %v1183 = vpop.f32.mrf.mxu0
        %v1184 = vadd.f32 %v1155, %v1183
        %1185 = vmatmul.f32.gmra.mxu0 %v1126
        %v1186 = vpop.f32.mrf.mxu0
        %v1187 = vadd.f32 %v1155, %v1186
        %1188 = vmatmul.f32.gmra.mxu0 %v1129
        %v1189 = vpop.f32.mrf.mxu0
        %v1190 = vadd.f32 %v1155, %v1189
        %1191 = vmatmul.f32.gmra.mxu0 %v1132
        %v1192 = vpop.f32.mrf.mxu0
        %v1193 = vadd.f32 %v1155, %v1192
        %1194 = vmatmul.f32.gmra.mxu0 %v1135
        %v1195 = vpop.f32.mrf.mxu0
        %v1196 = vadd.f32 %v1155, %v1195
        %1197 = vdwg.mxu0
        %v1198 = vadd.f32 %v1175, %v527
        %v1199 = vadd.f32 %v1178, %v528
        %v1200 = vadd.f32 %v1181, %v529
        %v1201 = vadd.f32 %v1184, %v530
        %v1202 = vadd.f32 %v1187, %v531
        %v1203 = vadd.f32 %v1190, %v532
        %v1204 = vadd.f32 %v1193, %v533
        %v1205 = vadd.f32 %v1196, %v534
        %1206 = vst [vmem:[#allocation2] sm:$0xff] %v1198
        %1207 = vst [vmem:[#allocation2 + $0x8] sm:$0xff] %v1199
        %1208 = vst [vmem:[#allocation2 + $0x10] sm:$0xff] %v1200
        %1209 = vst [vmem:[#allocation2 + $0x18] sm:$0xff] %v1201
        %1210 = vst [vmem:[#allocation2 + $0x20] sm:$0xff] %v1202
        %1211 = vst [vmem:[#allocation2 + $0x28] sm:$0xff] %v1203
        %1212 = vst [vmem:[#allocation2 + $0x30] sm:$0xff] %v1204
        %1213 = vst [vmem:[#allocation2 + $0x38] sm:$0xff] %v1205
        %p1214 = scmp.eq.s32.totalorder %s33, 2
        // Predicated region
        $region81: #{tpu_custom_call.1} parent=51 // pred_check
          %p1215 = pneg %p1214
        $region82: #{tpu_custom_call.1} parent=51 // pred_check_branch
          %1217 = sbr.rel (%p1215) target = $region84
        $region83: #{tpu_custom_call.1} parent=51 // pred_region
          %v1218 = vld [vmem:[#allocation16] sm:$0xff]
          %v1219 = vld [vmem:[#allocation16 + $0x8] sm:$0xff]
          %v1220 = vld [vmem:[#allocation16 + $0x10] sm:$0xff]
          %v1221 = vld [vmem:[#allocation16 + $0x18] sm:$0xff]
          %v1222 = vld [vmem:[#allocation16 + $0x20] sm:$0xff]
          %v1223 = vld [vmem:[#allocation16 + $0x28] sm:$0xff]
          %v1224 = vld [vmem:[#allocation16 + $0x30] sm:$0xff]
          %v1225 = vld [vmem:[#allocation16 + $0x38] sm:$0xff]
          %v1226 = vld [vmem:[#allocation16 + $0x40] sm:$0xff]
          %v1227 = vld [vmem:[#allocation16 + $0x48] sm:$0xff]
          %v1228 = vld [vmem:[#allocation16 + $0x50] sm:$0xff]
          %v1229 = vld [vmem:[#allocation16 + $0x58] sm:$0xff]
          %v1230 = vld [vmem:[#allocation16 + $0x60] sm:$0xff]
          %v1231 = vld [vmem:[#allocation16 + $0x68] sm:$0xff]
          %v1232 = vld [vmem:[#allocation16 + $0x70] sm:$0xff]
          %v1233 = vld [vmem:[#allocation16 + $0x78] sm:$0xff]
          %v1234 = vld [vmem:[%s7] sm:$0x1]
          %v1236 = vperm.slane %v1234, 0
          %1238 = vmatpush.msra.mxu0 %v1233
          %1239 = vmatpush.msra.mxu0 %v1232
          %1240 = vmatpush.msra.mxu0 %v1231
          %1241 = vmatpush.msra.mxu0 %v1230
          %1242 = vmatpush.msra.mxu0 %v1229
          %1243 = vmatpush.msra.mxu0 %v1228
          %1244 = vmatpush.msra.mxu0 %v1227
          %1245 = vmatpush.msra.mxu0 %v1226
          %1246 = vmatpush.msra.mxu0 %v1225
          %1247 = vmatpush.msra.mxu0 %v1224
          %1248 = vmatpush.msra.mxu0 %v1223
          %1249 = vmatpush.msra.mxu0 %v1222
          %1250 = vmatpush.msra.mxu0 %v1221
          %1251 = vmatpush.msra.mxu0 %v1220
          %1252 = vmatpush.msra.mxu0 %v1219
          %1253 = vmatpush.msra.mxu0 %v1218
          %1254 = vmatmul.f32.gmra.mxu0 %v1198
          %v1255 = vpop.f32.mrf.mxu0
          %v1256 = vadd.f32 %v1236, %v1255
          %1257 = vmatmul.f32.gmra.mxu0 %v1199
          %v1258 = vpop.f32.mrf.mxu0
          %v1259 = vadd.f32 %v1236, %v1258
          %1260 = vmatmul.f32.gmra.mxu0 %v1200
          %v1261 = vpop.f32.mrf.mxu0
          %v1262 = vadd.f32 %v1236, %v1261
          %1263 = vmatmul.f32.gmra.mxu0 %v1201
          %v1264 = vpop.f32.mrf.mxu0
          %v1265 = vadd.f32 %v1236, %v1264
          %1266 = vmatmul.f32.gmra.mxu0 %v1202
          %v1267 = vpop.f32.mrf.mxu0
          %v1268 = vadd.f32 %v1236, %v1267
          %1269 = vmatmul.f32.gmra.mxu0 %v1203
          %v1270 = vpop.f32.mrf.mxu0
          %v1271 = vadd.f32 %v1236, %v1270
          %1272 = vmatmul.f32.gmra.mxu0 %v1204
          %v1273 = vpop.f32.mrf.mxu0
          %v1274 = vadd.f32 %v1236, %v1273
          %1275 = vmatmul.f32.gmra.mxu0 %v1205
          %v1276 = vpop.f32.mrf.mxu0
          %v1277 = vadd.f32 %v1236, %v1276
          %1278 = vdwg.mxu0
          %1279 = vst [vmem:[#allocation18] sm:$0xff] %v1256
          %1280 = vst [vmem:[#allocation18 + $0x8] sm:$0xff] %v1259
          %1281 = vst [vmem:[#allocation18 + $0x10] sm:$0xff] %v1262
          %1282 = vst [vmem:[#allocation18 + $0x18] sm:$0xff] %v1265
          %1283 = vst [vmem:[#allocation18 + $0x20] sm:$0xff] %v1268
          %1284 = vst [vmem:[#allocation18 + $0x28] sm:$0xff] %v1271
          %1285 = vst [vmem:[#allocation18 + $0x30] sm:$0xff] %v1274
          %1286 = vst [vmem:[#allocation18 + $0x38] sm:$0xff] %v1277
        $region84: #{tpu_custom_call.1} parent=51 // pred_fallthru
          _
        // Predicated region
        $region85: #{tpu_custom_call.1} parent=51 // pred_check
          %p1287 = pneg %p256
        $region86: #{tpu_custom_call.1} parent=51 // pred_check_branch
          %1289 = sbr.rel (%p1287) target = $region88
        $region87: #{tpu_custom_call.1} parent=51 // pred_region
          %1291 = vsyncadd [#allocation9], 0
          %s1292 = smul.addr %s32, 8
          %s1293 = scalar_lea.hbm %s8, %s1292
          %s1294 = sshll.u32 [#allocation18], 4
          %s1295 = int_to_ptr.vmem [resolvable:$true] %s1294
          %s1296 = sshll.u32 %s1293, 4
          %s1297 = int_to_ptr.hbm [resolvable:$true] %s1296
          %1302 = dma.vmem_to_hbm [thread:$0]  %s1295, 1024, %s1297, [#allocation9], 128, 128, 8
        $region88: #{tpu_custom_call.1} parent=51 // pred_fallthru
          _
        // Predicated region
        $region89: #{tpu_custom_call.1} parent=51 // pred_check
          %p1303 = pneg %p256
        $region90: #{tpu_custom_call.1} parent=51 // pred_check_branch
          %1305 = sbr.rel (%p1303) target = $region92
        $region91: #{tpu_custom_call.1} parent=51 // pred_region
          %1307 = dma.done [#allocation9], 1024
        $region92: #{tpu_custom_call.1} parent=51 // pred_fallthru
          _
      $region52: #{tpu_custom_call.1} parent=5 // pred_fallthru
        _
      %p1308 = scmp.le.s32.totalorder 2, %s23
      // Predicated region
      $region93: #{tpu_custom_call.1} parent=5 // pred_check
        %p1309 = pneg %p1308
      $region94: #{tpu_custom_call.1} parent=5 // pred_check_branch
        %1311 = sbr.rel (%p1309) target = $region96
      $region95: #{tpu_custom_call.1} parent=5 // pred_region
        %s1312 = ssub.s32 %s23, 2
      $region96: #{tpu_custom_call.1} parent=5 // pred_fallthru
        _
    $region6: #{tpu_custom_call.1} parent=1 // loop_footer
      %s27 = sadd.s32 1, %s23
    $region7: #{tpu_custom_call.1} parent=1 // loop_footer_branch
      %22 = sbr.rel target = $region3
    $region8: #{tpu_custom_call.1} parent=1 // loop_exit
      _
    %1313 = vsyncpa [#allocation8], 1
    %s1314 = scalar_lea.sflag [#allocation8], 1
    %1315 = vsyncpa %s1314, 1
    %1316 = vsyncpa [#allocation11], 1
    %s1317 = scalar_lea.sflag [#allocation11], 1
    %1318 = vsyncpa %s1317, 1
    %1319 = vsyncpa [#allocation14], 1
    %s1320 = scalar_lea.sflag [#allocation14], 1
    %1321 = vsyncpa %s1320, 1
    %1322 = vsyncpa [#allocation17], 1
    %1323 = vsyncpa [#allocation9], 1
    %s1324 = scalar_lea.sflag [#allocation9], 1
    %1325 = vsyncpa %s1324, 1

</llo_original>
